<compile_context>
chip_gen: v5e
topology: v5e:2x2
jax: 0.10.0
libtpu: 0.0.40
codegen_flags: <defaults>
</compile_context>

<pallas_src>
import functools

import jax
import jax.numpy as jnp
from jax import lax
from jax.experimental import pallas as pl
from jax.experimental.pallas import tpu as pltpu

LN_EPS = 1e-5


def _layernorm_relu(h, gamma, beta):
    mean = jnp.mean(h, axis=-1, keepdims=True)
    var = jnp.mean(jnp.square(h - mean), axis=-1, keepdims=True)
    hn = (h - mean) * lax.rsqrt(var + LN_EPS)
    return jnp.maximum(hn * gamma + beta, 0.0)


# ------------------------------------------------------------ fused kernel --
def fused_mp_kernel(nodes_ref, pin_ref, pj_ref, edges_ref, adj_ref,
                    nw1e_ref, nb1_ref, ng_ref, nbe_ref, nw2_ref, nb2_ref,
                    ew1e_ref, eb1_ref, eg_ref, ebe_ref, ew2_ref, eb2_ref,
                    nodes_out_ref, edges_out_ref):
    f32 = jnp.float32
    cdt = nw1e_ref.dtype                  # matmul/compute dtype (f32 or bf16)

    nodes_t = nodes_ref[0]                # (TR, D)   node_i rows (residual only)
    p_in = pin_ref[0]                     # (TR, 2H)  [:, :H]=node_i@ew1i, [:, H:]=N*node_i@nw1n
    p_j = pj_ref[0]                       # (N, H)    node_j@ew1j, whole batch row
    edges2 = edges_ref[0]                 # (TR*N, E) flat (i, j) edge rows
    adj = adj_ref[0]                      # (TR, N)

    tr = nodes_t.shape[0]
    n, he = p_j.shape
    e = edges2.shape[-1]

    # ----------------------------------------------------------- node path --
    # messages[i] = cat([sum_j adj[i,j]*edges[i,j,:], N*nodes[i]]); cat @ W1 split;
    # the N*nodes[i]@W1n part is precomputed (p_in[:, H:]).
    edges3 = edges2.reshape(tr, n, e)                    # leading-dim split (layout no-op)
    msg_e = jnp.sum(edges3.astype(f32) * adj.astype(f32)[:, :, None], axis=1)   # f32 accumulate
    h = jnp.dot(msg_e.astype(cdt), nw1e_ref[...], preferred_element_type=f32)
    h = h + p_in[:, he:] + nb1_ref[...]
    hn = _layernorm_relu(h, ng_ref[...], nbe_ref[...])
    y = jnp.dot(hn.astype(cdt), nw2_ref[...], preferred_element_type=f32) + nb2_ref[...]
    nodes_out_ref[0] = (nodes_t.astype(f32) + y).astype(nodes_out_ref.dtype)

    # ----------------------------------------------------------- edge path --
    # cat([edges, node_i, node_j]) @ W1 == edges@W1e + node_i@W1i + node_j@W1j;
    # the node projections are precomputed (p_in[:, :H], p_j).
    pe = jnp.dot(edges2.astype(cdt), ew1e_ref[...], preferred_element_type=f32)   # (TR*N, H)
    h3 = pe.reshape(tr, n, he) + p_in[:, None, :he] + p_j[None, :, :] + eb1_ref[...]
    hn3 = _layernorm_relu(h3, eg_ref[...], ebe_ref[...])
    y2 = jnp.dot(hn3.reshape(tr * n, he).astype(cdt), ew2_ref[...],
                 preferred_element_type=f32) + eb2_ref[...]                       # (TR*N, E)
    edges_out_ref[0] = (edges2.astype(f32) + y2).astype(edges_out_ref.dtype)


# ----------------------------------------------------- VMEM / tile planning --
def _vmem_budget_and_cap():
    """(per-step working-set budget, vmem_limit cap) chosen by TPU generation."""
    try:
        vmem_cap = int(pltpu.get_tpu_info().vmem_capacity_bytes)
    except Exception:
        vmem_cap = 64 << 20                       # conservative fallback (v7x per-TC)
    if vmem_cap <= (64 << 20):                    # v7x: 64 MiB per TensorCore
        return 20 << 20, 48 << 20
    return 40 << 20, 96 << 20                     # v5e / v6e: 128 MiB physical


def _step_vmem_bytes(tr, N, D, E, H, nodes_dt, edges_dt, adj_dt, cdt):
    """Rough per-grid-step VMEM footprint (incl. double buffering), dtype-aware."""
    n_i, e_i, a_i, c_i = (jnp.dtype(d).itemsize for d in (nodes_dt, edges_dt, adj_dt, cdt))
    b = 2 * tr * N * E * (e_i + e_i)              # edges in + edges out blocks
    b += 2 * tr * N * a_i                         # adjacency rows
    b += 2 * tr * D * n_i * 2                     # node tile in + node out
    b += 2 * (tr * 2 * H + N * H) * 4             # p_in tile + p_j row (f32)
    b += 4 * tr * N * H * 4                       # pe / h3 / hn3 / y2 intermediates (f32)
    b += 2 * (2 * E * H + H * D + H * E) * c_i    # matmul weights (double-buffered)
    b += 2 * (5 * H + D + E) * 4                  # biases / LayerNorm params (f32)
    return b


def _pick_row_tile(N, D, E, H, nodes_dt, edges_dt, adj_dt, cdt, budget, force_multi):
    """Largest i-row tile (divisor of N, multiple of 8) whose working set fits the budget."""
    if N % 8 != 0:
        return N                                  # full-array-dim blocks always legal
    cands = [t for t in range(8, N + 1, 8) if N % t == 0]
    if force_multi:                               # B == 1: keep both v7x TCs busy
        sub = [t for t in cands if t < N]
        cands = sub if sub else cands
    best = cands[0]
    for t in cands:                               # footprint grows with t -> last fit is largest
        if _step_vmem_bytes(t, N, D, E, H, nodes_dt, edges_dt, adj_dt, cdt) <= budget:
            best = t
    return best


# ------------------------------------------------------------------ wrapper --
def message_passing_forward(nodes, edges, adjacency, params, *,
                            compute_dtype=jnp.float32):
    B, N, D = nodes.shape
    E = edges.shape[-1]
    H = params["node_b1"].shape[-1]
    cdt = jnp.dtype(compute_dtype)
    f32 = jnp.float32
    out_ndt, out_edt = nodes.dtype, edges.dtype

    budget, limit_cap = _vmem_budget_and_cap()
    TR = _pick_row_tile(N, D, E, H, nodes.dtype, edges.dtype, adjacency.dtype,
                        cdt, budget, force_multi=(B == 1))
    n_tiles = N // TR

    # Fold every node-feature matmul into one full-width (B*N, D) @ (D, 3H)
    # matmul done once per call (full MXU fill, no per-i-tile recompute of the
    # node_j projection).  The xN factor from the j-sum is folded into the weight.
    w_stack = jnp.concatenate(
        [params["edge_w1"][E:E + D],                         # node_i  -> edge hidden
         jnp.float32(N) * params["node_w1"][E:],             # node    -> node hidden (x N)
         params["edge_w1"][E + D:]], axis=1).astype(cdt)     # node_j  -> edge hidden
    p_all = jnp.dot(nodes.reshape(B * N, D).astype(cdt), w_stack,
                    preferred_element_type=f32).reshape(B, N, 3 * H)
    p_in = p_all[..., :2 * H]            # (B, N, 2H)  read per i-tile
    p_j = p_all[..., 2 * H:]             # (B, N, H)   read whole batch row

    # Edges stay in their incoming HBM dtype: the flat reshape is metadata-only,
    # and there is NO extra wrapper-side cast pass over the dominant tensor.
    edges_flat = edges.reshape(B, N * N, E)

    row = lambda v: v.reshape(1, -1).astype(f32)
    n_w1e = params["node_w1"][:E].astype(cdt)
    n_w2 = params["node_w2"].astype(cdt)
    e_w1e = params["edge_w1"][:E].astype(cdt)
    e_w2 = params["edge_w2"].astype(cdt)

    const = lambda b, it: (0, 0)

    est = _step_vmem_bytes(TR, N, D, E, H, nodes.dtype, edges.dtype,
                           adjacency.dtype, cdt)
    # Always >= 32 MiB (never below any generation's default scoped limit, and
    # covers v5e's 16 MiB default), capped per generation (48 MiB on v7x).
    vmem_limit = int(min(max(est * 3 // 2, 32 << 20), limit_cap))
    compiler_params = pltpu.CompilerParams(
        dimension_semantics=("parallel", "parallel"),
        vmem_limit_bytes=vmem_limit)

    nodes_out, edges_out = pl.pallas_call(
        fused_mp_kernel,
        out_shape=(jax.ShapeDtypeStruct((B, N, D), out_ndt),
                   jax.ShapeDtypeStruct((B, N * N, E), out_edt)),
        grid_spec=pltpu.PrefetchScalarGridSpec(
            num_scalar_prefetch=0,
            grid=(B, n_tiles),
            in_specs=[
                pl.BlockSpec((1, TR, D), lambda b, it: (b, it, 0)),       # node_i tile (residual)
                pl.BlockSpec((1, TR, 2 * H), lambda b, it: (b, it, 0)),   # node_i / node-path projections
                pl.BlockSpec((1, N, H), lambda b, it: (b, 0, 0)),         # node_j projection (whole row)
                pl.BlockSpec((1, TR * N, E), lambda b, it: (b, it, 0)),   # edges, flat (i, j) rows
                pl.BlockSpec((1, TR, N), lambda b, it: (b, it, 0)),       # adjacency rows
                pl.BlockSpec((E, H), const),
                pl.BlockSpec((1, H), const),
                pl.BlockSpec((1, H), const),
                pl.BlockSpec((1, H), const),
                pl.BlockSpec((H, D), const),
                pl.BlockSpec((1, D), const),
                pl.BlockSpec((E, H), const),
                pl.BlockSpec((1, H), const),
                pl.BlockSpec((1, H), const),
                pl.BlockSpec((1, H), const),
                pl.BlockSpec((H, E), const),
                pl.BlockSpec((1, E), const),
            ],
            out_specs=[
                pl.BlockSpec((1, TR, D), lambda b, it: (b, it, 0)),
                pl.BlockSpec((1, TR * N, E), lambda b, it: (b, it, 0)),
            ],
        ),
        compiler_params=compiler_params,
    )(nodes, p_in, p_j, edges_flat, adjacency,
      n_w1e, row(params["node_b1"]), row(params["node_g"]),
      row(params["node_be"]), n_w2, row(params["node_b2"]),
      e_w1e, row(params["edge_b1"]), row(params["edge_g"]),
      row(params["edge_be"]), e_w2, row(params["edge_b2"]))

    return nodes_out, edges_out.reshape(B, N, N, E)


# ------------------------------------------------------- pure-JAX reference --
def reference_forward(nodes, edges, adjacency, p):
    B, N, D = nodes.shape
    E = edges.shape[-1]

    def mlp(x, w1, b1, g, be, w2, b2):
        h = x @ w1 + b1
        mean = h.mean(-1, keepdims=True)
        var = ((h - mean) ** 2).mean(-1, keepdims=True)
        h = (h - mean) / jnp.sqrt(var + LN_EPS) * g + be
        h = jnp.maximum(h, 0.0)
        return h @ w2 + b2

    edges_adj = edges * adjacency[..., None]
    nodes_exp = jnp.broadcast_to(nodes[:, :, None, :], (B, N, N, D))
    messages = jnp.concatenate([edges_adj, nodes_exp], axis=-1).sum(axis=2)
    nodes_upd = nodes + mlp(messages, p["node_w1"], p["node_b1"], p["node_g"],
                            p["node_be"], p["node_w2"], p["node_b2"])

    nodes_i = jnp.broadcast_to(nodes[:, :, None, :], (B, N, N, D))
    nodes_j = jnp.broadcast_to(nodes[:, None, :, :], (B, N, N, D))
    edge_in = jnp.concatenate([edges, nodes_i, nodes_j], axis=-1)
    edges_upd = edges + mlp(edge_in, p["edge_w1"], p["edge_b1"], p["edge_g"],
                            p["edge_be"], p["edge_w2"], p["edge_b2"])
    return nodes_upd, edges_upd


def init_params(key, node_dim, edge_dim, hidden_dim):
    ks = jax.random.split(key, 8)
    f = jnp.float32
    return {
        # weights stored [in, out] (transposed vs. torch.nn.Linear)
        "node_w1": 0.02 * jax.random.normal(ks[0], (node_dim + edge_dim, hidden_dim), f),
        "node_b1": 0.01 * jax.random.normal(ks[1], (hidden_dim,), f),
        "node_g": jnp.ones((hidden_dim,), f),
        "node_be": jnp.zeros((hidden_dim,), f),
        "node_w2": 0.02 * jax.random.normal(ks[2], (hidden_dim, node_dim), f),
        "node_b2": 0.01 * jax.random.normal(ks[3], (node_dim,), f),
        "edge_w1": 0.02 * jax.random.normal(ks[4], (edge_dim + 2 * node_dim, hidden_dim), f),
        "edge_b1": 0.01 * jax.random.normal(ks[5], (hidden_dim,), f),
        "edge_g": jnp.ones((hidden_dim,), f),
        "edge_be": jnp.zeros((hidden_dim,), f),
        "edge_w2": 0.02 * jax.random.normal(ks[6], (hidden_dim, edge_dim), f),
        "edge_b2": 0.01 * jax.random.normal(ks[7], (edge_dim,), f),
    }


if __name__ == "__main__":
    B, N = 2, 8
    node_dim, edge_dim, hidden_dim = 256, 64, 128

    key = jax.random.PRNGKey(0)
    k_n, k_e, k_a, k_p = jax.random.split(key, 4)
    nodes = jax.random.normal(k_n, (B, N, node_dim), jnp.float32)
    edges = jax.random.normal(k_e, (B, N, N, edge_dim), jnp.float32)
    adjacency = (jax.random.uniform(k_a, (B, N, N)) > 0.5).astype(jnp.float32)
    params = init_params(k_p, node_dim, edge_dim, hidden_dim)

    ref_nodes, ref_edges = reference_forward(nodes, edges, adjacency, params)

    # f32 path (tight check)
    fwd = jax.jit(functools.partial(message_passing_forward, params=params))
    nodes_out, edges_out = fwd(nodes, edges, adjacency)
    jax.block_until_ready((nodes_out, edges_out))
    assert jnp.allclose(nodes_out, ref_nodes, atol=2e-4, rtol=2e-4), "node mismatch (f32)"
    assert jnp.allclose(edges_out, ref_edges, atol=2e-4, rtol=2e-4), "edge mismatch (f32)"

    # bf16 MXU path: bf16 matmul operands only; HBM tensors, j-sum, LayerNorm and
    # residuals stay f32, so the only error is matmul rounding.
    fwd_bf16 = jax.jit(functools.partial(message_passing_forward, params=params,
                                         compute_dtype=jnp.bfloat16))
    nodes_bf, edges_bf = fwd_bf16(nodes, edges, adjacency)
    jax.block_until_ready((nodes_bf, edges_bf))
    assert jnp.allclose(nodes_bf, ref_nodes, atol=5e-2, rtol=5e-2), "node mismatch (bf16)"
    assert jnp.allclose(edges_bf, ref_edges, atol=5e-2, rtol=5e-2), "edge mismatch (bf16)"

    print("KERNEL_OK")
</pallas_src>

<mosaic_0001>
module attributes {stable_mosaic.version = 11 : i64} {
  func.func @fused_mp_kernel(%arg0: i32, %arg1: i32, %arg2: memref<1x8x256xf32, #tpu.memory_space<vmem>>, %arg3: memref<1x8x256xf32, #tpu.memory_space<vmem>>, %arg4: memref<1x8x128xf32, #tpu.memory_space<vmem>>, %arg5: memref<1x64x64xf32, #tpu.memory_space<vmem>>, %arg6: memref<1x8x8xf32, #tpu.memory_space<vmem>>, %arg7: memref<64x128xf32, #tpu.memory_space<vmem>>, %arg8: memref<1x128xf32, #tpu.memory_space<vmem>>, %arg9: memref<1x128xf32, #tpu.memory_space<vmem>>, %arg10: memref<1x128xf32, #tpu.memory_space<vmem>>, %arg11: memref<128x256xf32, #tpu.memory_space<vmem>>, %arg12: memref<1x256xf32, #tpu.memory_space<vmem>>, %arg13: memref<64x128xf32, #tpu.memory_space<vmem>>, %arg14: memref<1x128xf32, #tpu.memory_space<vmem>>, %arg15: memref<1x128xf32, #tpu.memory_space<vmem>>, %arg16: memref<1x128xf32, #tpu.memory_space<vmem>>, %arg17: memref<128x64xf32, #tpu.memory_space<vmem>>, %arg18: memref<1x64xf32, #tpu.memory_space<vmem>>, %arg19: memref<1x8x256xf32, #tpu.memory_space<vmem>>, %arg20: memref<1x64x64xf32, #tpu.memory_space<vmem>>) attributes {dimension_semantics = [#tpu.dimension_semantics<parallel>, #tpu.dimension_semantics<parallel>], iteration_bounds = array<i64: 2, 1>, scalar_prefetch = 0 : i64, scratch_operands = 0 : i64, tpu.core_type = #tpu.core_type<tc>, window_params = [{transform_indices = @transform_0, window_bounds = array<i64: 1, 8, 256>}, {transform_indices = @transform_1, window_bounds = array<i64: 1, 8, 256>}, {transform_indices = @transform_2, window_bounds = array<i64: 1, 8, 128>}, {transform_indices = @transform_3, window_bounds = array<i64: 1, 64, 64>}, {transform_indices = @transform_4, window_bounds = array<i64: 1, 8, 8>}, {pipeline_mode = #tpu.pipeline_mode<synchronous>, transform_indices = @transform_5, window_bounds = array<i64: 64, 128>}, {pipeline_mode = #tpu.pipeline_mode<synchronous>, transform_indices = @transform_6, window_bounds = array<i64: 1, 128>}, {pipeline_mode = #tpu.pipeline_mode<synchronous>, transform_indices = @transform_7, window_bounds = array<i64: 1, 128>}, {pipeline_mode = #tpu.pipeline_mode<synchronous>, transform_indices = @transform_8, window_bounds = array<i64: 1, 128>}, {pipeline_mode = #tpu.pipeline_mode<synchronous>, transform_indices = @transform_9, window_bounds = array<i64: 128, 256>}, {pipeline_mode = #tpu.pipeline_mode<synchronous>, transform_indices = @transform_10, window_bounds = array<i64: 1, 256>}, {pipeline_mode = #tpu.pipeline_mode<synchronous>, transform_indices = @transform_11, window_bounds = array<i64: 64, 128>}, {pipeline_mode = #tpu.pipeline_mode<synchronous>, transform_indices = @transform_12, window_bounds = array<i64: 1, 128>}, {pipeline_mode = #tpu.pipeline_mode<synchronous>, transform_indices = @transform_13, window_bounds = array<i64: 1, 128>}, {pipeline_mode = #tpu.pipeline_mode<synchronous>, transform_indices = @transform_14, window_bounds = array<i64: 1, 128>}, {pipeline_mode = #tpu.pipeline_mode<synchronous>, transform_indices = @transform_15, window_bounds = array<i64: 128, 64>}, {pipeline_mode = #tpu.pipeline_mode<synchronous>, transform_indices = @transform_16, window_bounds = array<i64: 1, 64>}, {transform_indices = @transform_17, window_bounds = array<i64: 1, 8, 256>}, {transform_indices = @transform_18, window_bounds = array<i64: 1, 64, 64>}]} {
    %c0 = arith.constant 0 : index
    %c0_0 = arith.constant 0 : index
    %c0_1 = arith.constant 0 : index
    %0 = vector.load %arg2[%c0, %c0_0, %c0_1] : memref<1x8x256xf32, #tpu.memory_space<vmem>>, vector<1x8x256xf32>
    %1 = vector.shape_cast %0 : vector<1x8x256xf32> to vector<8x256xf32>
    %c0_2 = arith.constant 0 : index
    %c0_3 = arith.constant 0 : index
    %c0_4 = arith.constant 0 : index
    %2 = vector.load %arg3[%c0_2, %c0_3, %c0_4] : memref<1x8x256xf32, #tpu.memory_space<vmem>>, vector<1x8x256xf32>
    %3 = vector.shape_cast %2 : vector<1x8x256xf32> to vector<8x256xf32>
    %c0_5 = arith.constant 0 : index
    %c0_6 = arith.constant 0 : index
    %c0_7 = arith.constant 0 : index
    %4 = vector.load %arg4[%c0_5, %c0_6, %c0_7] : memref<1x8x128xf32, #tpu.memory_space<vmem>>, vector<1x8x128xf32>
    %5 = vector.shape_cast %4 : vector<1x8x128xf32> to vector<8x128xf32>
    %c0_8 = arith.constant 0 : index
    %c0_9 = arith.constant 0 : index
    %c0_10 = arith.constant 0 : index
    %6 = vector.load %arg5[%c0_8, %c0_9, %c0_10] : memref<1x64x64xf32, #tpu.memory_space<vmem>>, vector<1x64x64xf32>
    %7 = vector.shape_cast %6 : vector<1x64x64xf32> to vector<64x64xf32>
    %c0_11 = arith.constant 0 : index
    %c0_12 = arith.constant 0 : index
    %c0_13 = arith.constant 0 : index
    %8 = vector.load %arg6[%c0_11, %c0_12, %c0_13] : memref<1x8x8xf32, #tpu.memory_space<vmem>>, vector<1x8x8xf32>
    %9 = vector.shape_cast %8 : vector<1x8x8xf32> to vector<8x8xf32>
    %10 = vector.shape_cast %7 : vector<64x64xf32> to vector<8x8x64xf32>
    %11 = vector.shape_cast %9 : vector<8x8xf32> to vector<8x8x1xf32>
    %12 = vector.broadcast %11 : vector<8x8x1xf32> to vector<8x8x64xf32>
    %13 = arith.mulf %10, %12 : vector<8x8x64xf32>
    %cst = arith.constant dense<0.000000e+00> : vector<8x64xf32>
    %14 = vector.multi_reduction <add>, %13, %cst [1] : vector<8x8x64xf32> to vector<8x64xf32>
    %c0_14 = arith.constant 0 : index
    %c0_15 = arith.constant 0 : index
    %15 = vector.load %arg7[%c0_14, %c0_15] : memref<64x128xf32, #tpu.memory_space<vmem>>, vector<64x128xf32>
    %cst_16 = arith.constant dense<0.000000e+00> : vector<8x128xf32>
    %16 = tpu.matmul %14, %15, %cst_16 {dimension_numbers = #tpu.dot_dimension_numbers<[1], [0], [0], [1], [0, 0, 1, 1], [], []>} : vector<8x64xf32>, vector<64x128xf32>, vector<8x128xf32> -> vector<8x128xf32>
    %17 = vector.extract_strided_slice %3 {offsets = [0, 128], sizes = [8, 128], strides = [1, 1]} : vector<8x256xf32> to vector<8x128xf32>
    %18 = arith.addf %16, %17 : vector<8x128xf32>
    %c0_17 = arith.constant 0 : index
    %c0_18 = arith.constant 0 : index
    %19 = vector.load %arg8[%c0_17, %c0_18] : memref<1x128xf32, #tpu.memory_space<vmem>>, vector<1x128xf32>
    %20 = vector.broadcast %19 : vector<1x128xf32> to vector<8x128xf32>
    %21 = arith.addf %18, %20 : vector<8x128xf32>
    %c0_19 = arith.constant 0 : index
    %c0_20 = arith.constant 0 : index
    %22 = vector.load %arg9[%c0_19, %c0_20] : memref<1x128xf32, #tpu.memory_space<vmem>>, vector<1x128xf32>
    %c0_21 = arith.constant 0 : index
    %c0_22 = arith.constant 0 : index
    %23 = vector.load %arg10[%c0_21, %c0_22] : memref<1x128xf32, #tpu.memory_space<vmem>>, vector<1x128xf32>
    %cst_23 = arith.constant dense<0.000000e+00> : vector<8xf32>
    %24 = vector.multi_reduction <add>, %21, %cst_23 [1] : vector<8x128xf32> to vector<8xf32>
    %25 = vector.shape_cast %24 : vector<8xf32> to vector<8x1xf32>
    %cst_24 = arith.constant 1.280000e+02 : f32
    %26 = vector.broadcast %cst_24 : f32 to vector<8x1xf32>
    %27 = arith.divf %25, %26 : vector<8x1xf32>
    %28 = vector.broadcast %27 : vector<8x1xf32> to vector<8x128xf32>
    %29 = arith.subf %21, %28 : vector<8x128xf32>
    %30 = arith.mulf %29, %29 : vector<8x128xf32>
    %cst_25 = arith.constant dense<0.000000e+00> : vector<8xf32>
    %31 = vector.multi_reduction <add>, %30, %cst_25 [1] : vector<8x128xf32> to vector<8xf32>
    %32 = vector.shape_cast %31 : vector<8xf32> to vector<8x1xf32>
    %cst_26 = arith.constant 1.280000e+02 : f32
    %33 = vector.broadcast %cst_26 : f32 to vector<8x1xf32>
    %34 = arith.divf %32, %33 : vector<8x1xf32>
    %35 = vector.broadcast %27 : vector<8x1xf32> to vector<8x128xf32>
    %36 = arith.subf %21, %35 : vector<8x128xf32>
    %cst_27 = arith.constant 9.99999974E-6 : f32
    %37 = vector.broadcast %cst_27 : f32 to vector<8x1xf32>
    %38 = arith.addf %34, %37 : vector<8x1xf32>
    %39 = math.rsqrt %38 : vector<8x1xf32>
    %40 = vector.broadcast %39 : vector<8x1xf32> to vector<8x128xf32>
    %41 = arith.mulf %36, %40 : vector<8x128xf32>
    %42 = vector.broadcast %22 : vector<1x128xf32> to vector<8x128xf32>
    %43 = arith.mulf %41, %42 : vector<8x128xf32>
    %44 = vector.broadcast %23 : vector<1x128xf32> to vector<8x128xf32>
    %45 = arith.addf %43, %44 : vector<8x128xf32>
    %cst_28 = arith.constant 0.000000e+00 : f32
    %46 = vector.broadcast %cst_28 : f32 to vector<8x128xf32>
    %47 = arith.maximumf %45, %46 : vector<8x128xf32>
    %c0_29 = arith.constant 0 : index
    %c0_30 = arith.constant 0 : index
    %48 = vector.load %arg11[%c0_29, %c0_30] : memref<128x256xf32, #tpu.memory_space<vmem>>, vector<128x256xf32>
    %cst_31 = arith.constant dense<0.000000e+00> : vector<8x256xf32>
    %49 = tpu.matmul %47, %48, %cst_31 {dimension_numbers = #tpu.dot_dimension_numbers<[1], [0], [0], [1], [0, 0, 1, 1], [], []>} : vector<8x128xf32>, vector<128x256xf32>, vector<8x256xf32> -> vector<8x256xf32>
    %c0_32 = arith.constant 0 : index
    %c0_33 = arith.constant 0 : index
    %50 = vector.load %arg12[%c0_32, %c0_33] : memref<1x256xf32, #tpu.memory_space<vmem>>, vector<1x256xf32>
    %51 = vector.broadcast %50 : vector<1x256xf32> to vector<8x256xf32>
    %52 = arith.addf %49, %51 : vector<8x256xf32>
    %53 = arith.addf %1, %52 : vector<8x256xf32>
    %c0_34 = arith.constant 0 : index
    %c0_35 = arith.constant 0 : index
    %c0_36 = arith.constant 0 : index
    %54 = vector.load %arg19[%c0_34, %c0_35, %c0_36] : memref<1x8x256xf32, #tpu.memory_space<vmem>>, vector<1x8x256xf32>
    %55 = vector.shape_cast %54 : vector<1x8x256xf32> to vector<8x256xf32>
    %56 = vector.shape_cast %53 : vector<8x256xf32> to vector<1x8x256xf32>
    tpu.vector_store %arg19[%c0_34, %c0_35, %c0_36], %56 {strides = array<i32>} : memref<1x8x256xf32, #tpu.memory_space<vmem>>, vector<1x8x256xf32>,
    %c0_37 = arith.constant 0 : index
    %c0_38 = arith.constant 0 : index
    %57 = vector.load %arg13[%c0_37, %c0_38] : memref<64x128xf32, #tpu.memory_space<vmem>>, vector<64x128xf32>
    %cst_39 = arith.constant dense<0.000000e+00> : vector<64x128xf32>
    %58 = tpu.matmul %7, %57, %cst_39 {dimension_numbers = #tpu.dot_dimension_numbers<[1], [0], [0], [1], [0, 0, 1, 1], [], []>} : vector<64x64xf32>, vector<64x128xf32>, vector<64x128xf32> -> vector<64x128xf32>
    %59 = vector.shape_cast %58 : vector<64x128xf32> to vector<8x8x128xf32>
    %60 = vector.extract_strided_slice %3 {offsets = [0, 0], sizes = [8, 128], strides = [1, 1]} : vector<8x256xf32> to vector<8x128xf32>
    %61 = vector.shape_cast %60 : vector<8x128xf32> to vector<8x1x128xf32>
    %62 = vector.broadcast %61 : vector<8x1x128xf32> to vector<8x8x128xf32>
    %63 = arith.addf %59, %62 : vector<8x8x128xf32>
    %64 = vector.shape_cast %5 : vector<8x128xf32> to vector<1x8x128xf32>
    %65 = vector.broadcast %64 : vector<1x8x128xf32> to vector<8x8x128xf32>
    %66 = arith.addf %63, %65 : vector<8x8x128xf32>
    %c0_40 = arith.constant 0 : index
    %c0_41 = arith.constant 0 : index
    %67 = vector.load %arg14[%c0_40, %c0_41] : memref<1x128xf32, #tpu.memory_space<vmem>>, vector<1x128xf32>
    %68 = vector.shape_cast %67 : vector<1x128xf32> to vector<1x1x128xf32>
    %69 = vector.broadcast %68 : vector<1x1x128xf32> to vector<8x8x128xf32>
    %70 = arith.addf %66, %69 : vector<8x8x128xf32>
    %c0_42 = arith.constant 0 : index
    %c0_43 = arith.constant 0 : index
    %71 = vector.load %arg15[%c0_42, %c0_43] : memref<1x128xf32, #tpu.memory_space<vmem>>, vector<1x128xf32>
    %c0_44 = arith.constant 0 : index
    %c0_45 = arith.constant 0 : index
    %72 = vector.load %arg16[%c0_44, %c0_45] : memref<1x128xf32, #tpu.memory_space<vmem>>, vector<1x128xf32>
    %cst_46 = arith.constant dense<0.000000e+00> : vector<8x8xf32>
    %73 = vector.multi_reduction <add>, %70, %cst_46 [2] : vector<8x8x128xf32> to vector<8x8xf32>
    %74 = vector.shape_cast %73 : vector<8x8xf32> to vector<8x8x1xf32>
    %cst_47 = arith.constant 1.280000e+02 : f32
    %75 = vector.broadcast %cst_47 : f32 to vector<8x8x1xf32>
    %76 = arith.divf %74, %75 : vector<8x8x1xf32>
    %77 = vector.broadcast %76 : vector<8x8x1xf32> to vector<8x8x128xf32>
    %78 = arith.subf %70, %77 : vector<8x8x128xf32>
    %79 = arith.mulf %78, %78 : vector<8x8x128xf32>
    %cst_48 = arith.constant dense<0.000000e+00> : vector<8x8xf32>
    %80 = vector.multi_reduction <add>, %79, %cst_48 [2] : vector<8x8x128xf32> to vector<8x8xf32>
    %81 = vector.shape_cast %80 : vector<8x8xf32> to vector<8x8x1xf32>
    %cst_49 = arith.constant 1.280000e+02 : f32
    %82 = vector.broadcast %cst_49 : f32 to vector<8x8x1xf32>
    %83 = arith.divf %81, %82 : vector<8x8x1xf32>
    %84 = vector.broadcast %76 : vector<8x8x1xf32> to vector<8x8x128xf32>
    %85 = arith.subf %70, %84 : vector<8x8x128xf32>
    %cst_50 = arith.constant 9.99999974E-6 : f32
    %86 = vector.broadcast %cst_50 : f32 to vector<8x8x1xf32>
    %87 = arith.addf %83, %86 : vector<8x8x1xf32>
    %88 = math.rsqrt %87 : vector<8x8x1xf32>
    %89 = vector.broadcast %88 : vector<8x8x1xf32> to vector<8x8x128xf32>
    %90 = arith.mulf %85, %89 : vector<8x8x128xf32>
    %91 = vector.shape_cast %71 : vector<1x128xf32> to vector<1x1x128xf32>
    %92 = vector.broadcast %91 : vector<1x1x128xf32> to vector<8x8x128xf32>
    %93 = arith.mulf %90, %92 : vector<8x8x128xf32>
    %94 = vector.shape_cast %72 : vector<1x128xf32> to vector<1x1x128xf32>
    %95 = vector.broadcast %94 : vector<1x1x128xf32> to vector<8x8x128xf32>
    %96 = arith.addf %93, %95 : vector<8x8x128xf32>
    %cst_51 = arith.constant 0.000000e+00 : f32
    %97 = vector.broadcast %cst_51 : f32 to vector<8x8x128xf32>
    %98 = arith.maximumf %96, %97 : vector<8x8x128xf32>
    %99 = vector.shape_cast %98 : vector<8x8x128xf32> to vector<64x128xf32>
    %c0_52 = arith.constant 0 : index
    %c0_53 = arith.constant 0 : index
    %100 = vector.load %arg17[%c0_52, %c0_53] : memref<128x64xf32, #tpu.memory_space<vmem>>, vector<128x64xf32>
    %cst_54 = arith.constant dense<0.000000e+00> : vector<64x64xf32>
    %101 = tpu.matmul %99, %100, %cst_54 {dimension_numbers = #tpu.dot_dimension_numbers<[1], [0], [0], [1], [0, 0, 1, 1], [], []>} : vector<64x128xf32>, vector<128x64xf32>, vector<64x64xf32> -> vector<64x64xf32>
    %c0_55 = arith.constant 0 : index
    %c0_56 = arith.constant 0 : index
    %102 = vector.load %arg18[%c0_55, %c0_56] : memref<1x64xf32, #tpu.memory_space<vmem>>, vector<1x64xf32>
    %103 = vector.broadcast %102 : vector<1x64xf32> to vector<64x64xf32>
    %104 = arith.addf %101, %103 : vector<64x64xf32>
    %105 = arith.addf %7, %104 : vector<64x64xf32>
    %c0_57 = arith.constant 0 : index
    %c0_58 = arith.constant 0 : index
    %c0_59 = arith.constant 0 : index
    %106 = vector.load %arg20[%c0_57, %c0_58, %c0_59] : memref<1x64x64xf32, #tpu.memory_space<vmem>>, vector<1x64x64xf32>
    %107 = vector.shape_cast %106 : vector<1x64x64xf32> to vector<64x64xf32>
    %108 = vector.shape_cast %105 : vector<64x64xf32> to vector<1x64x64xf32>
    tpu.vector_store %arg20[%c0_57, %c0_58, %c0_59], %108 {strides = array<i32>} : memref<1x64x64xf32, #tpu.memory_space<vmem>>, vector<1x64x64xf32>,
    return
  }
  func.func @transform_0(%arg0: i32, %arg1: i32) -> (i32, i32, i32) {
    %c0_i32 = arith.constant 0 : i32
    %c0_i32_0 = arith.constant 0 : i32
    return %arg0, %arg1, %c0_i32 : i32, i32, i32
  }
  func.func @transform_1(%arg0: i32, %arg1: i32) -> (i32, i32, i32) {
    %c0_i32 = arith.constant 0 : i32
    %c0_i32_0 = arith.constant 0 : i32
    return %arg0, %arg1, %c0_i32 : i32, i32, i32
  }
  func.func @transform_2(%arg0: i32, %arg1: i32) -> (i32, i32, i32) {
    %c0_i32 = arith.constant 0 : i32
    %c0_i32_0 = arith.constant 0 : i32
    %c0_i32_1 = arith.constant 0 : i32
    return %arg0, %c0_i32, %c0_i32_0 : i32, i32, i32
  }
  func.func @transform_3(%arg0: i32, %arg1: i32) -> (i32, i32, i32) {
    %c0_i32 = arith.constant 0 : i32
    %c0_i32_0 = arith.constant 0 : i32
    return %arg0, %arg1, %c0_i32 : i32, i32, i32
  }
  func.func @transform_4(%arg0: i32, %arg1: i32) -> (i32, i32, i32) {
    %c0_i32 = arith.constant 0 : i32
    %c0_i32_0 = arith.constant 0 : i32
    return %arg0, %arg1, %c0_i32 : i32, i32, i32
  }
  func.func @transform_5(%arg0: i32, %arg1: i32) -> (i32, i32) {
    %c0_i32 = arith.constant 0 : i32
    %c0_i32_0 = arith.constant 0 : i32
    %c0_i32_1 = arith.constant 0 : i32
    return %c0_i32, %c0_i32_0 : i32, i32
  }
  func.func @transform_6(%arg0: i32, %arg1: i32) -> (i32, i32) {
    %c0_i32 = arith.constant 0 : i32
    %c0_i32_0 = arith.constant 0 : i32
    %c0_i32_1 = arith.constant 0 : i32
    return %c0_i32, %c0_i32_0 : i32, i32
  }
  func.func @transform_7(%arg0: i32, %arg1: i32) -> (i32, i32) {
    %c0_i32 = arith.constant 0 : i32
    %c0_i32_0 = arith.constant 0 : i32
    %c0_i32_1 = arith.constant 0 : i32
    return %c0_i32, %c0_i32_0 : i32, i32
  }
  func.func @transform_8(%arg0: i32, %arg1: i32) -> (i32, i32) {
    %c0_i32 = arith.constant 0 : i32
    %c0_i32_0 = arith.constant 0 : i32
    %c0_i32_1 = arith.constant 0 : i32
    return %c0_i32, %c0_i32_0 : i32, i32
  }
  func.func @transform_9(%arg0: i32, %arg1: i32) -> (i32, i32) {
    %c0_i32 = arith.constant 0 : i32
    %c0_i32_0 = arith.constant 0 : i32
    %c0_i32_1 = arith.constant 0 : i32
    return %c0_i32, %c0_i32_0 : i32, i32
  }
  func.func @transform_10(%arg0: i32, %arg1: i32) -> (i32, i32) {
    %c0_i32 = arith.constant 0 : i32
    %c0_i32_0 = arith.constant 0 : i32
    %c0_i32_1 = arith.constant 0 : i32
    return %c0_i32, %c0_i32_0 : i32, i32
  }
  func.func @transform_11(%arg0: i32, %arg1: i32) -> (i32, i32) {
    %c0_i32 = arith.constant 0 : i32
    %c0_i32_0 = arith.constant 0 : i32
    %c0_i32_1 = arith.constant 0 : i32
    return %c0_i32, %c0_i32_0 : i32, i32
  }
  func.func @transform_12(%arg0: i32, %arg1: i32) -> (i32, i32) {
    %c0_i32 = arith.constant 0 : i32
    %c0_i32_0 = arith.constant 0 : i32
    %c0_i32_1 = arith.constant 0 : i32
    return %c0_i32, %c0_i32_0 : i32, i32
  }
  func.func @transform_13(%arg0: i32, %arg1: i32) -> (i32, i32) {
    %c0_i32 = arith.constant 0 : i32
    %c0_i32_0 = arith.constant 0 : i32
    %c0_i32_1 = arith.constant 0 : i32
    return %c0_i32, %c0_i32_0 : i32, i32
  }
  func.func @transform_14(%arg0: i32, %arg1: i32) -> (i32, i32) {
    %c0_i32 = arith.constant 0 : i32
    %c0_i32_0 = arith.constant 0 : i32
    %c0_i32_1 = arith.constant 0 : i32
    return %c0_i32, %c0_i32_0 : i32, i32
  }
  func.func @transform_15(%arg0: i32, %arg1: i32) -> (i32, i32) {
    %c0_i32 = arith.constant 0 : i32
    %c0_i32_0 = arith.constant 0 : i32
    %c0_i32_1 = arith.constant 0 : i32
    return %c0_i32, %c0_i32_0 : i32, i32
  }
  func.func @transform_16(%arg0: i32, %arg1: i32) -> (i32, i32) {
    %c0_i32 = arith.constant 0 : i32
    %c0_i32_0 = arith.constant 0 : i32
    %c0_i32_1 = arith.constant 0 : i32
    return %c0_i32, %c0_i32_0 : i32, i32
  }
  func.func @transform_17(%arg0: i32, %arg1: i32) -> (i32, i32, i32) {
    %c0_i32 = arith.constant 0 : i32
    %c0_i32_0 = arith.constant 0 : i32
    return %arg0, %arg1, %c0_i32 : i32, i32, i32
  }
  func.func @transform_18(%arg0: i32, %arg1: i32) -> (i32, i32, i32) {
    %c0_i32 = arith.constant 0 : i32
    %c0_i32_0 = arith.constant 0 : i32
    return %arg0, %arg1, %c0_i32 : i32, i32, i32
  }
}

</mosaic_0001>

<llo_original>
// kernel: message_passing_forward.1
$region0: #{message_passing_forward.1}
  #allocation0 [shape = 'u32[]', space=smem, size = 0x4, offset = 0x4, fixed_abs, tag = 'smem constant byte address 0x4 - core index']
  #allocation1 [shape = 'u32[72,128]{1,0:T(1,128)}', space=vmem, size = 0x9000, scoped, tag = 'internal scratch']
  %s0 = inlined_call_operand.vmem [shape: f32[2,8,256], index: 0, kind: input, shape index: {}]
  %s1 = inlined_call_operand.vmem [shape: f32[2,8,256], index: 1, kind: input, shape index: {}]
  %s2 = inlined_call_operand.vmem [shape: f32[2,8,128], index: 2, kind: input, shape index: {}]
  %s3 = inlined_call_operand.vmem [shape: f32[2,64,64], index: 3, kind: input, shape index: {}]
  %s4 = inlined_call_operand.vmem [shape: f32[2,8,8], index: 4, kind: input, shape index: {}]
  %s5 = inlined_call_operand.hbm [shape: f32[64,128], index: 5, kind: input, shape index: {}]
  %s6 = inlined_call_operand.vmem [shape: f32[1,128], index: 6, kind: input, shape index: {}]
  %s7 = inlined_call_operand.vmem [shape: f32[1,128], index: 7, kind: input, shape index: {}, may-alias: {7,13}]
  %s8 = inlined_call_operand.vmem [shape: f32[1,128], index: 8, kind: input, shape index: {}, may-alias: {8,14}]
  %s9 = inlined_call_operand.vmem [shape: f32[128,256], index: 9, kind: input, shape index: {}]
  %s10 = inlined_call_operand.vmem [shape: f32[1,256], index: 10, kind: input, shape index: {}]
  %s11 = inlined_call_operand.hbm [shape: f32[64,128], index: 11, kind: input, shape index: {}]
  %s12 = inlined_call_operand.vmem [shape: f32[1,128], index: 12, kind: input, shape index: {}]
  %s13 = inlined_call_operand.vmem [shape: f32[1,128], index: 13, kind: input, shape index: {}, may-alias: {7,13}]
  %s14 = inlined_call_operand.vmem [shape: f32[1,128], index: 14, kind: input, shape index: {}, may-alias: {8,14}]
  %s15 = inlined_call_operand.vmem [shape: f32[128,64], index: 15, kind: input, shape index: {}]
  %s16 = inlined_call_operand.vmem [shape: f32[1,64], index: 16, kind: input, shape index: {}]
  %s17 = inlined_call_operand.hbm [shape: f32[2,8,256], index: 17, kind: output, shape index: {0}]
  %s18 = inlined_call_operand.hbm [shape: f32[2,64,64], index: 18, kind: output, shape index: {1}]
  %19 = xla_tuple %s17, %s18
  %s20 = sld [smem:[#allocation0]]
  $region117: #{message_passing_forward.1} parent=0
    _
  %s22 = ssub.s32 1, %s20
  %s23 = scalar_select 0, %s22, %s20
  $region1: #{message_passing_forward.1} parent=0
    #allocation2 [shape = 'u8[32768]{0}', space=vmem, size = 0x8000, scoped, tag = 'input window, operand 5, single buffered']
    #allocation3 [shape = 's32[2]{0}', space=sflag, size = 0x8, scoped, tag = 'scoped memory for message_passing_forward.1']
    #allocation4 [shape = 's32[2]{0}', space=sflag, size = 0x8, scoped, tag = 'scoped memory for message_passing_forward.1']
    #allocation5 [shape = 'u8[32768]{0}', space=vmem, size = 0x8000, scoped, tag = 'input window, operand 11, single buffered']
    #allocation6 [shape = 's32[1]{0}', space=sflag, size = 0x4, scoped, tag = 'scoped memory for message_passing_forward.1']
    #allocation7 [shape = 'u8[16384]{0}', space=vmem, size = 0x4000, scoped, tag = 'output window, operand 0']
    #allocation8 [shape = 'u8[65536]{0}', space=vmem, size = 0x10000, scoped, tag = 'output window, operand 1']
    #allocation9 [shape = 's32[2]{0}', space=sflag, size = 0x8, scoped, tag = 'scoped memory for message_passing_forward.1']
    %24 = vsyncpa [#allocation3], 0
    %25 = vsyncpa [#allocation6], 0
    %26 = vsyncpa [#allocation4], 0
    %s27 = scalar_lea.sflag [#allocation4], 1
    %28 = vsyncpa %s27, 0
    %29 = vsyncpa [#allocation9], 0
    %s30 = scalar_lea.sflag [#allocation9], 1
    %31 = vsyncpa %s30, 0
    loop: start=0, step=1, limit=4
    $region2: #{message_passing_forward.1} parent=1 // loop_pre_header
      _
    $region3: #{message_passing_forward.1} parent=1 // loop_header
      %s33 = sphi 0, %s37
      %p34 = scmp.ge.s32.totalorder %s33, 4
      %s40 = sphi 0, %s52
      %s41 = sphi 0, %s48
      %s42 = sphi 0, %s40
      %s43 = sphi 0, %s41
      %s44 = sphi 0, %s42
      %s45 = sphi 0, %s43
      %s57 = sphi 0, %s59
      %s60 = sphi 0, %s57
      %s61 = sphi 0, %s60
      %s77 = sphi 0, %s61
      %s85 = sphi 0, %s87
      %s88 = sphi 0, %s85
      %s89 = sphi 0, %s88
      %s105 = sphi 0, %s89
      %s111 = sphi 0, %s113
      %s114 = sphi 0, %s111
      %s115 = sphi 0, %s114
      %s131 = sphi 0, %s115
      %s139 = sphi 0, %s141
      %s142 = sphi 0, %s139
      %s143 = sphi 0, %s142
      %s159 = sphi 0, %s143
      %s167 = sphi 0, %s169
      %s170 = sphi 0, %s167
      %s171 = sphi 0, %s170
      %s187 = sphi 0, %s171
      %s191 = sphi 0, %s191
      %s193 = sphi 0, %s191
      %s194 = sphi 0, %s193
      %s208 = sphi 0, %s194
      %s212 = sphi 0, %s212
      %s214 = sphi 0, %s212
      %s215 = sphi 0, %s214
      %s229 = sphi 0, %s215
      %s233 = sphi 0, %s233
      %s235 = sphi 0, %s233
      %s236 = sphi 0, %s235
      %s250 = sphi 0, %s236
      %s254 = sphi 0, %s254
      %s256 = sphi 0, %s254
      %s257 = sphi 0, %s256
      %s271 = sphi 0, %s257
      %s275 = sphi 0, %s275
      %s277 = sphi 0, %s275
      %s278 = sphi 0, %s277
      %s292 = sphi 0, %s278
      %s296 = sphi 0, %s296
      %s298 = sphi 0, %s296
      %s299 = sphi 0, %s298
      %s313 = sphi 0, %s299
      %s317 = sphi 0, %s317
      %s319 = sphi 0, %s317
      %s320 = sphi 0, %s319
      %s334 = sphi 0, %s320
      %s338 = sphi 0, %s338
      %s340 = sphi 0, %s338
      %s341 = sphi 0, %s340
      %s355 = sphi 0, %s341
      %s359 = sphi 0, %s359
      %s361 = sphi 0, %s359
      %s362 = sphi 0, %s361
      %s376 = sphi 0, %s362
      %s380 = sphi 0, %s380
      %s382 = sphi 0, %s380
      %s383 = sphi 0, %s382
      %s397 = sphi 0, %s383
      %s401 = sphi 0, %s401
      %s403 = sphi 0, %s401
      %s404 = sphi 0, %s403
      %s418 = sphi 0, %s404
      %s422 = sphi 0, %s422
      %s424 = sphi 0, %s422
      %s425 = sphi 0, %s424
      %s439 = sphi 0, %s425
      %s447 = sphi 0, %s449
      %s450 = sphi 0, %s447
      %s451 = sphi 0, %s450
      %s467 = sphi 0, %s451
      %s475 = sphi 0, %s477
      %s478 = sphi 0, %s475
      %s479 = sphi 0, %s478
      %s495 = sphi 0, %s479
    $region4: #{message_passing_forward.1} parent=1 // loop_header_branch
      %36 = sbr.rel (%p34) target = $region8
    $region5: #{message_passing_forward.1} parent=1 // loop_body
      %s38 = ssub.s32 %s33, 1
      %s39 = ssub.s32 %s33, 2
      %s46 = sadd.s32 1, %s41
      %p47 = scmp.ge.s32.totalorder %s46, 1
      %s48 = scalar_select %p47, 0, %s46
      %s49 = sadd.s32 1, %s40
      %s50 = scalar_select %p47, %s49, %s40
      %p51 = scmp.ge.s32.totalorder %s50, 2
      %s52 = scalar_select %p51, 0, %s50
      %s53 = ssub.s32 %s40, %s52
      %s54 = ssub.s32 %s41, %s48
      %s55 = sor.u32 %s53, %s54
      %p56 = scmp.eq.s32.totalorder %s55, 0
      %s58 = sadd.s32 %s57, 1
      %s59 = scalar_select %p56, %s57, %s58
      %p62 = pneg %p56
      %p63 = scmp.eq.s32.totalorder %s33, 1
      %p64 = por %p62, %p63
      %p65 = scmp.ne.s32.totalorder %s57, %s60
      %p66 = scmp.eq.s32.totalorder %s33, 0
      %p67 = por %p65, %p66
      %p68 = scmp.ne.s32.totalorder %s57, %s60
      %p69 = scmp.eq.s32.totalorder %s38, 1
      %p70 = por %p68, %p69
      %p71 = scmp.ne.s32.totalorder %s60, %s61
      %p72 = scmp.eq.s32.totalorder %s38, 0
      %p73 = por %p71, %p72
      %p74 = scmp.ne.s32.totalorder %s60, %s61
      %p75 = scmp.eq.s32.totalorder %s39, 1
      %p76 = por %p74, %p75
      %p78 = scmp.ne.s32.totalorder %s61, %s77
      %p79 = scmp.eq.s32.totalorder %s39, 0
      %p80 = por %p78, %p79
      %s81 = ssub.s32 %s40, %s52
      %s82 = ssub.s32 %s41, %s48
      %s83 = sor.u32 %s81, %s82
      %p84 = scmp.eq.s32.totalorder %s83, 0
      %s86 = sadd.s32 %s85, 1
      %s87 = scalar_select %p84, %s85, %s86
      %p90 = pneg %p84
      %p91 = scmp.eq.s32.totalorder %s33, 1
      %p92 = por %p90, %p91
      %p93 = scmp.ne.s32.totalorder %s85, %s88
      %p94 = scmp.eq.s32.totalorder %s33, 0
      %p95 = por %p93, %p94
      %p96 = scmp.ne.s32.totalorder %s85, %s88
      %p97 = scmp.eq.s32.totalorder %s38, 1
      %p98 = por %p96, %p97
      %p99 = scmp.ne.s32.totalorder %s88, %s89
      %p100 = scmp.eq.s32.totalorder %s38, 0
      %p101 = por %p99, %p100
      %p102 = scmp.ne.s32.totalorder %s88, %s89
      %p103 = scmp.eq.s32.totalorder %s39, 1
      %p104 = por %p102, %p103
      %p106 = scmp.ne.s32.totalorder %s89, %s105
      %p107 = scmp.eq.s32.totalorder %s39, 0
      %p108 = por %p106, %p107
      %s109 = ssub.s32 %s40, %s52
      %p110 = scmp.eq.s32.totalorder %s109, 0
      %s112 = sadd.s32 %s111, 1
      %s113 = scalar_select %p110, %s111, %s112
      %p116 = pneg %p110
      %p117 = scmp.eq.s32.totalorder %s33, 1
      %p118 = por %p116, %p117
      %p119 = scmp.ne.s32.totalorder %s111, %s114
      %p120 = scmp.eq.s32.totalorder %s33, 0
      %p121 = por %p119, %p120
      %p122 = scmp.ne.s32.totalorder %s111, %s114
      %p123 = scmp.eq.s32.totalorder %s38, 1
      %p124 = por %p122, %p123
      %p125 = scmp.ne.s32.totalorder %s114, %s115
      %p126 = scmp.eq.s32.totalorder %s38, 0
      %p127 = por %p125, %p126
      %p128 = scmp.ne.s32.totalorder %s114, %s115
      %p129 = scmp.eq.s32.totalorder %s39, 1
      %p130 = por %p128, %p129
      %p132 = scmp.ne.s32.totalorder %s115, %s131
      %p133 = scmp.eq.s32.totalorder %s39, 0
      %p134 = por %p132, %p133
      %s135 = ssub.s32 %s40, %s52
      %s136 = ssub.s32 %s41, %s48
      %s137 = sor.u32 %s135, %s136
      %p138 = scmp.eq.s32.totalorder %s137, 0
      %s140 = sadd.s32 %s139, 1
      %s141 = scalar_select %p138, %s139, %s140
      %p144 = pneg %p138
      %p145 = scmp.eq.s32.totalorder %s33, 1
      %p146 = por %p144, %p145
      %p147 = scmp.ne.s32.totalorder %s139, %s142
      %p148 = scmp.eq.s32.totalorder %s33, 0
      %p149 = por %p147, %p148
      %p150 = scmp.ne.s32.totalorder %s139, %s142
      %p151 = scmp.eq.s32.totalorder %s38, 1
      %p152 = por %p150, %p151
      %p153 = scmp.ne.s32.totalorder %s142, %s143
      %p154 = scmp.eq.s32.totalorder %s38, 0
      %p155 = por %p153, %p154
      %p156 = scmp.ne.s32.totalorder %s142, %s143
      %p157 = scmp.eq.s32.totalorder %s39, 1
      %p158 = por %p156, %p157
      %p160 = scmp.ne.s32.totalorder %s143, %s159
      %p161 = scmp.eq.s32.totalorder %s39, 0
      %p162 = por %p160, %p161
      %s163 = ssub.s32 %s40, %s52
      %s164 = ssub.s32 %s41, %s48
      %s165 = sor.u32 %s163, %s164
      %p166 = scmp.eq.s32.totalorder %s165, 0
      %s168 = sadd.s32 %s167, 1
      %s169 = scalar_select %p166, %s167, %s168
      %p172 = pneg %p166
      %p173 = scmp.eq.s32.totalorder %s33, 1
      %p174 = por %p172, %p173
      %p175 = scmp.ne.s32.totalorder %s167, %s170
      %p176 = scmp.eq.s32.totalorder %s33, 0
      %p177 = por %p175, %p176
      %p178 = scmp.ne.s32.totalorder %s167, %s170
      %p179 = scmp.eq.s32.totalorder %s38, 1
      %p180 = por %p178, %p179
      %p181 = scmp.ne.s32.totalorder %s170, %s171
      %p182 = scmp.eq.s32.totalorder %s38, 0
      %p183 = por %p181, %p182
      %p184 = scmp.ne.s32.totalorder %s170, %s171
      %p185 = scmp.eq.s32.totalorder %s39, 1
      %p186 = por %p184, %p185
      %p188 = scmp.ne.s32.totalorder %s171, %s187
      %p189 = scmp.eq.s32.totalorder %s39, 0
      %p190 = por %p188, %p189
      %s192 = sadd.s32 %s191, 1
      %p195 = scmp.eq.s32.totalorder %s33, 1
      %p196 = scmp.ne.s32.totalorder %s191, %s193
      %p197 = scmp.eq.s32.totalorder %s33, 0
      %p198 = por %p196, %p197
      %p199 = scmp.ne.s32.totalorder %s191, %s193
      %p200 = scmp.eq.s32.totalorder %s38, 1
      %p201 = por %p199, %p200
      %p202 = scmp.ne.s32.totalorder %s193, %s194
      %p203 = scmp.eq.s32.totalorder %s38, 0
      %p204 = por %p202, %p203
      %p205 = scmp.ne.s32.totalorder %s193, %s194
      %p206 = scmp.eq.s32.totalorder %s39, 1
      %p207 = por %p205, %p206
      %p209 = scmp.ne.s32.totalorder %s194, %s208
      %p210 = scmp.eq.s32.totalorder %s39, 0
      %p211 = por %p209, %p210
      %s213 = sadd.s32 %s212, 1
      %p216 = scmp.eq.s32.totalorder %s33, 1
      %p217 = scmp.ne.s32.totalorder %s212, %s214
      %p218 = scmp.eq.s32.totalorder %s33, 0
      %p219 = por %p217, %p218
      %p220 = scmp.ne.s32.totalorder %s212, %s214
      %p221 = scmp.eq.s32.totalorder %s38, 1
      %p222 = por %p220, %p221
      %p223 = scmp.ne.s32.totalorder %s214, %s215
      %p224 = scmp.eq.s32.totalorder %s38, 0
      %p225 = por %p223, %p224
      %p226 = scmp.ne.s32.totalorder %s214, %s215
      %p227 = scmp.eq.s32.totalorder %s39, 1
      %p228 = por %p226, %p227
      %p230 = scmp.ne.s32.totalorder %s215, %s229
      %p231 = scmp.eq.s32.totalorder %s39, 0
      %p232 = por %p230, %p231
      %s234 = sadd.s32 %s233, 1
      %p237 = scmp.eq.s32.totalorder %s33, 1
      %p238 = scmp.ne.s32.totalorder %s233, %s235
      %p239 = scmp.eq.s32.totalorder %s33, 0
      %p240 = por %p238, %p239
      %p241 = scmp.ne.s32.totalorder %s233, %s235
      %p242 = scmp.eq.s32.totalorder %s38, 1
      %p243 = por %p241, %p242
      %p244 = scmp.ne.s32.totalorder %s235, %s236
      %p245 = scmp.eq.s32.totalorder %s38, 0
      %p246 = por %p244, %p245
      %p247 = scmp.ne.s32.totalorder %s235, %s236
      %p248 = scmp.eq.s32.totalorder %s39, 1
      %p249 = por %p247, %p248
      %p251 = scmp.ne.s32.totalorder %s236, %s250
      %p252 = scmp.eq.s32.totalorder %s39, 0
      %p253 = por %p251, %p252
      %s255 = sadd.s32 %s254, 1
      %p258 = scmp.eq.s32.totalorder %s33, 1
      %p259 = scmp.ne.s32.totalorder %s254, %s256
      %p260 = scmp.eq.s32.totalorder %s33, 0
      %p261 = por %p259, %p260
      %p262 = scmp.ne.s32.totalorder %s254, %s256
      %p263 = scmp.eq.s32.totalorder %s38, 1
      %p264 = por %p262, %p263
      %p265 = scmp.ne.s32.totalorder %s256, %s257
      %p266 = scmp.eq.s32.totalorder %s38, 0
      %p267 = por %p265, %p266
      %p268 = scmp.ne.s32.totalorder %s256, %s257
      %p269 = scmp.eq.s32.totalorder %s39, 1
      %p270 = por %p268, %p269
      %p272 = scmp.ne.s32.totalorder %s257, %s271
      %p273 = scmp.eq.s32.totalorder %s39, 0
      %p274 = por %p272, %p273
      %s276 = sadd.s32 %s275, 1
      %p279 = scmp.eq.s32.totalorder %s33, 1
      %p280 = scmp.ne.s32.totalorder %s275, %s277
      %p281 = scmp.eq.s32.totalorder %s33, 0
      %p282 = por %p280, %p281
      %p283 = scmp.ne.s32.totalorder %s275, %s277
      %p284 = scmp.eq.s32.totalorder %s38, 1
      %p285 = por %p283, %p284
      %p286 = scmp.ne.s32.totalorder %s277, %s278
      %p287 = scmp.eq.s32.totalorder %s38, 0
      %p288 = por %p286, %p287
      %p289 = scmp.ne.s32.totalorder %s277, %s278
      %p290 = scmp.eq.s32.totalorder %s39, 1
      %p291 = por %p289, %p290
      %p293 = scmp.ne.s32.totalorder %s278, %s292
      %p294 = scmp.eq.s32.totalorder %s39, 0
      %p295 = por %p293, %p294
      %s297 = sadd.s32 %s296, 1
      %p300 = scmp.eq.s32.totalorder %s33, 1
      %p301 = scmp.ne.s32.totalorder %s296, %s298
      %p302 = scmp.eq.s32.totalorder %s33, 0
      %p303 = por %p301, %p302
      %p304 = scmp.ne.s32.totalorder %s296, %s298
      %p305 = scmp.eq.s32.totalorder %s38, 1
      %p306 = por %p304, %p305
      %p307 = scmp.ne.s32.totalorder %s298, %s299
      %p308 = scmp.eq.s32.totalorder %s38, 0
      %p309 = por %p307, %p308
      %p310 = scmp.ne.s32.totalorder %s298, %s299
      %p311 = scmp.eq.s32.totalorder %s39, 1
      %p312 = por %p310, %p311
      %p314 = scmp.ne.s32.totalorder %s299, %s313
      %p315 = scmp.eq.s32.totalorder %s39, 0
      %p316 = por %p314, %p315
      %s318 = sadd.s32 %s317, 1
      %p321 = scmp.eq.s32.totalorder %s33, 1
      %p322 = scmp.ne.s32.totalorder %s317, %s319
      %p323 = scmp.eq.s32.totalorder %s33, 0
      %p324 = por %p322, %p323
      %p325 = scmp.ne.s32.totalorder %s317, %s319
      %p326 = scmp.eq.s32.totalorder %s38, 1
      %p327 = por %p325, %p326
      %p328 = scmp.ne.s32.totalorder %s319, %s320
      %p329 = scmp.eq.s32.totalorder %s38, 0
      %p330 = por %p328, %p329
      %p331 = scmp.ne.s32.totalorder %s319, %s320
      %p332 = scmp.eq.s32.totalorder %s39, 1
      %p333 = por %p331, %p332
      %p335 = scmp.ne.s32.totalorder %s320, %s334
      %p336 = scmp.eq.s32.totalorder %s39, 0
      %p337 = por %p335, %p336
      %s339 = sadd.s32 %s338, 1
      %p342 = scmp.eq.s32.totalorder %s33, 1
      %p343 = scmp.ne.s32.totalorder %s338, %s340
      %p344 = scmp.eq.s32.totalorder %s33, 0
      %p345 = por %p343, %p344
      %p346 = scmp.ne.s32.totalorder %s338, %s340
      %p347 = scmp.eq.s32.totalorder %s38, 1
      %p348 = por %p346, %p347
      %p349 = scmp.ne.s32.totalorder %s340, %s341
      %p350 = scmp.eq.s32.totalorder %s38, 0
      %p351 = por %p349, %p350
      %p352 = scmp.ne.s32.totalorder %s340, %s341
      %p353 = scmp.eq.s32.totalorder %s39, 1
      %p354 = por %p352, %p353
      %p356 = scmp.ne.s32.totalorder %s341, %s355
      %p357 = scmp.eq.s32.totalorder %s39, 0
      %p358 = por %p356, %p357
      %s360 = sadd.s32 %s359, 1
      %p363 = scmp.eq.s32.totalorder %s33, 1
      %p364 = scmp.ne.s32.totalorder %s359, %s361
      %p365 = scmp.eq.s32.totalorder %s33, 0
      %p366 = por %p364, %p365
      %p367 = scmp.ne.s32.totalorder %s359, %s361
      %p368 = scmp.eq.s32.totalorder %s38, 1
      %p369 = por %p367, %p368
      %p370 = scmp.ne.s32.totalorder %s361, %s362
      %p371 = scmp.eq.s32.totalorder %s38, 0
      %p372 = por %p370, %p371
      %p373 = scmp.ne.s32.totalorder %s361, %s362
      %p374 = scmp.eq.s32.totalorder %s39, 1
      %p375 = por %p373, %p374
      %p377 = scmp.ne.s32.totalorder %s362, %s376
      %p378 = scmp.eq.s32.totalorder %s39, 0
      %p379 = por %p377, %p378
      %s381 = sadd.s32 %s380, 1
      %p384 = scmp.eq.s32.totalorder %s33, 1
      %p385 = scmp.ne.s32.totalorder %s380, %s382
      %p386 = scmp.eq.s32.totalorder %s33, 0
      %p387 = por %p385, %p386
      %p388 = scmp.ne.s32.totalorder %s380, %s382
      %p389 = scmp.eq.s32.totalorder %s38, 1
      %p390 = por %p388, %p389
      %p391 = scmp.ne.s32.totalorder %s382, %s383
      %p392 = scmp.eq.s32.totalorder %s38, 0
      %p393 = por %p391, %p392
      %p394 = scmp.ne.s32.totalorder %s382, %s383
      %p395 = scmp.eq.s32.totalorder %s39, 1
      %p396 = por %p394, %p395
      %p398 = scmp.ne.s32.totalorder %s383, %s397
      %p399 = scmp.eq.s32.totalorder %s39, 0
      %p400 = por %p398, %p399
      %s402 = sadd.s32 %s401, 1
      %p405 = scmp.eq.s32.totalorder %s33, 1
      %p406 = scmp.ne.s32.totalorder %s401, %s403
      %p407 = scmp.eq.s32.totalorder %s33, 0
      %p408 = por %p406, %p407
      %p409 = scmp.ne.s32.totalorder %s401, %s403
      %p410 = scmp.eq.s32.totalorder %s38, 1
      %p411 = por %p409, %p410
      %p412 = scmp.ne.s32.totalorder %s403, %s404
      %p413 = scmp.eq.s32.totalorder %s38, 0
      %p414 = por %p412, %p413
      %p415 = scmp.ne.s32.totalorder %s403, %s404
      %p416 = scmp.eq.s32.totalorder %s39, 1
      %p417 = por %p415, %p416
      %p419 = scmp.ne.s32.totalorder %s404, %s418
      %p420 = scmp.eq.s32.totalorder %s39, 0
      %p421 = por %p419, %p420
      %s423 = sadd.s32 %s422, 1
      %p426 = scmp.eq.s32.totalorder %s33, 1
      %p427 = scmp.ne.s32.totalorder %s422, %s424
      %p428 = scmp.eq.s32.totalorder %s33, 0
      %p429 = por %p427, %p428
      %p430 = scmp.ne.s32.totalorder %s422, %s424
      %p431 = scmp.eq.s32.totalorder %s38, 1
      %p432 = por %p430, %p431
      %p433 = scmp.ne.s32.totalorder %s424, %s425
      %p434 = scmp.eq.s32.totalorder %s38, 0
      %p435 = por %p433, %p434
      %p436 = scmp.ne.s32.totalorder %s424, %s425
      %p437 = scmp.eq.s32.totalorder %s39, 1
      %p438 = por %p436, %p437
      %p440 = scmp.ne.s32.totalorder %s425, %s439
      %p441 = scmp.eq.s32.totalorder %s39, 0
      %p442 = por %p440, %p441
      %s443 = ssub.s32 %s40, %s52
      %s444 = ssub.s32 %s41, %s48
      %s445 = sor.u32 %s443, %s444
      %p446 = scmp.eq.s32.totalorder %s445, 0
      %s448 = sadd.s32 %s447, 1
      %s449 = scalar_select %p446, %s447, %s448
      %p452 = pneg %p446
      %p453 = scmp.eq.s32.totalorder %s33, 1
      %p454 = por %p452, %p453
      %p455 = scmp.ne.s32.totalorder %s447, %s450
      %p456 = scmp.eq.s32.totalorder %s33, 0
      %p457 = por %p455, %p456
      %p458 = scmp.ne.s32.totalorder %s447, %s450
      %p459 = scmp.eq.s32.totalorder %s38, 1
      %p460 = por %p458, %p459
      %p461 = scmp.ne.s32.totalorder %s450, %s451
      %p462 = scmp.eq.s32.totalorder %s38, 0
      %p463 = por %p461, %p462
      %p464 = scmp.ne.s32.totalorder %s450, %s451
      %p465 = scmp.eq.s32.totalorder %s39, 1
      %p466 = por %p464, %p465
      %p468 = scmp.ne.s32.totalorder %s451, %s467
      %p469 = scmp.eq.s32.totalorder %s39, 0
      %p470 = por %p468, %p469
      %s471 = ssub.s32 %s40, %s52
      %s472 = ssub.s32 %s41, %s48
      %s473 = sor.u32 %s471, %s472
      %p474 = scmp.eq.s32.totalorder %s473, 0
      %s476 = sadd.s32 %s475, 1
      %s477 = scalar_select %p474, %s475, %s476
      %p480 = pneg %p474
      %p481 = scmp.eq.s32.totalorder %s33, 1
      %p482 = por %p480, %p481
      %p483 = scmp.ne.s32.totalorder %s475, %s478
      %p484 = scmp.eq.s32.totalorder %s33, 0
      %p485 = por %p483, %p484
      %p486 = scmp.ne.s32.totalorder %s475, %s478
      %p487 = scmp.eq.s32.totalorder %s38, 1
      %p488 = por %p486, %p487
      %p489 = scmp.ne.s32.totalorder %s478, %s479
      %p490 = scmp.eq.s32.totalorder %s38, 0
      %p491 = por %p489, %p490
      %p492 = scmp.ne.s32.totalorder %s478, %s479
      %p493 = scmp.eq.s32.totalorder %s39, 1
      %p494 = por %p492, %p493
      %p496 = scmp.ne.s32.totalorder %s479, %s495
      %p497 = scmp.eq.s32.totalorder %s39, 0
      %p498 = por %p496, %p497
      %p499 = scmp.le.s32.totalorder 1, %s33
      %p500 = scmp.lt.s32.totalorder %s33, 3
      %p501 = pnand %p499, %p500
      %p502 = pneg %p501
      // Predicated region
      $region9: #{message_passing_forward.1} parent=5 // pred_check
        _
      $region10: #{message_passing_forward.1} parent=5 // pred_check_branch
        %504 = sbr.rel (%p501) target = $region12
      $region11: #{message_passing_forward.1} parent=5 // pred_region
        %s505 = ssub.s32 %s33, 1
        // Predicated region
        $region13: #{message_passing_forward.1} parent=11 // pred_check
          %p506 = pneg %p204
        $region14: #{message_passing_forward.1} parent=11 // pred_check_branch
          %508 = sbr.rel (%p506) target = $region16
        $region15: #{message_passing_forward.1} parent=11 // pred_region
          %510 = vsyncadd [#allocation3], 0
          %s511 = sshll.u32 %s5, 4
          %s512 = int_to_ptr.hbm [resolvable:$true] %s511
          %s513 = sshll.u32 [#allocation2], 4
          %s514 = int_to_ptr.vmem [resolvable:$true] %s513
          %519 = dma.hbm_to_vmem [thread:$0]  %s512, 1024, %s514, [#allocation3], 128, 128, 8
        $region16: #{message_passing_forward.1} parent=11 // pred_fallthru
          _
        // Predicated region
        $region17: #{message_passing_forward.1} parent=11 // pred_check
          %p520 = pneg %p225
        $region18: #{message_passing_forward.1} parent=11 // pred_check_branch
          %522 = sbr.rel (%p520) target = $region20
        $region19: #{message_passing_forward.1} parent=11 // pred_region
          _
        $region20: #{message_passing_forward.1} parent=11 // pred_fallthru
          _
        // Predicated region
        $region21: #{message_passing_forward.1} parent=11 // pred_check
          %p523 = pneg %p246
        $region22: #{message_passing_forward.1} parent=11 // pred_check_branch
          %525 = sbr.rel (%p523) target = $region24
        $region23: #{message_passing_forward.1} parent=11 // pred_region
          _
        $region24: #{message_passing_forward.1} parent=11 // pred_fallthru
          _
        // Predicated region
        $region25: #{message_passing_forward.1} parent=11 // pred_check
          %p526 = pneg %p267
        $region26: #{message_passing_forward.1} parent=11 // pred_check_branch
          %528 = sbr.rel (%p526) target = $region28
        $region27: #{message_passing_forward.1} parent=11 // pred_region
          _
        $region28: #{message_passing_forward.1} parent=11 // pred_fallthru
          _
        // Predicated region
        $region29: #{message_passing_forward.1} parent=11 // pred_check
          %p529 = pneg %p288
        $region30: #{message_passing_forward.1} parent=11 // pred_check_branch
          %531 = sbr.rel (%p529) target = $region32
        $region31: #{message_passing_forward.1} parent=11 // pred_region
          _
        $region32: #{message_passing_forward.1} parent=11 // pred_fallthru
          _
        // Predicated region
        $region33: #{message_passing_forward.1} parent=11 // pred_check
          %p532 = pneg %p309
        $region34: #{message_passing_forward.1} parent=11 // pred_check_branch
          %534 = sbr.rel (%p532) target = $region36
        $region35: #{message_passing_forward.1} parent=11 // pred_region
          _
        $region36: #{message_passing_forward.1} parent=11 // pred_fallthru
          _
        // Predicated region
        $region37: #{message_passing_forward.1} parent=11 // pred_check
          %p535 = pneg %p330
        $region38: #{message_passing_forward.1} parent=11 // pred_check_branch
          %537 = sbr.rel (%p535) target = $region40
        $region39: #{message_passing_forward.1} parent=11 // pred_region
          %539 = vsyncadd [#allocation6], 0
          %s540 = sshll.u32 %s11, 4
          %s541 = int_to_ptr.hbm [resolvable:$true] %s540
          %s542 = sshll.u32 [#allocation5], 4
          %s543 = int_to_ptr.vmem [resolvable:$true] %s542
          %548 = dma.hbm_to_vmem [thread:$0]  %s541, 1024, %s543, [#allocation6], 128, 128, 8
        $region40: #{message_passing_forward.1} parent=11 // pred_fallthru
          _
        // Predicated region
        $region41: #{message_passing_forward.1} parent=11 // pred_check
          %p549 = pneg %p351
        $region42: #{message_passing_forward.1} parent=11 // pred_check_branch
          %551 = sbr.rel (%p549) target = $region44
        $region43: #{message_passing_forward.1} parent=11 // pred_region
          _
        $region44: #{message_passing_forward.1} parent=11 // pred_fallthru
          _
        // Predicated region
        $region45: #{message_passing_forward.1} parent=11 // pred_check
          %p552 = pneg %p372
        $region46: #{message_passing_forward.1} parent=11 // pred_check_branch
          %554 = sbr.rel (%p552) target = $region48
        $region47: #{message_passing_forward.1} parent=11 // pred_region
          _
        $region48: #{message_passing_forward.1} parent=11 // pred_fallthru
          _
        // Predicated region
        $region49: #{message_passing_forward.1} parent=11 // pred_check
          %p555 = pneg %p393
        $region50: #{message_passing_forward.1} parent=11 // pred_check_branch
          %557 = sbr.rel (%p555) target = $region52
        $region51: #{message_passing_forward.1} parent=11 // pred_region
          _
        $region52: #{message_passing_forward.1} parent=11 // pred_fallthru
          _
        // Predicated region
        $region53: #{message_passing_forward.1} parent=11 // pred_check
          %p558 = pneg %p414
        $region54: #{message_passing_forward.1} parent=11 // pred_check_branch
          %560 = sbr.rel (%p558) target = $region56
        $region55: #{message_passing_forward.1} parent=11 // pred_region
          _
        $region56: #{message_passing_forward.1} parent=11 // pred_fallthru
          _
        // Predicated region
        $region57: #{message_passing_forward.1} parent=11 // pred_check
          %p561 = pneg %p435
        $region58: #{message_passing_forward.1} parent=11 // pred_check_branch
          %563 = sbr.rel (%p561) target = $region60
        $region59: #{message_passing_forward.1} parent=11 // pred_region
          _
        $region60: #{message_passing_forward.1} parent=11 // pred_fallthru
          _
      $region12: #{message_passing_forward.1} parent=5 // pred_fallthru
        _
      %p564 = scmp.lt.s32.totalorder %s33, 2
      // Predicated region
      $region61: #{message_passing_forward.1} parent=5 // pred_check
        %p565 = pneg %p564
      $region62: #{message_passing_forward.1} parent=5 // pred_check_branch
        %567 = sbr.rel (%p565) target = $region64
      $region63: #{message_passing_forward.1} parent=5 // pred_region
        // Predicated region
        $region65: #{message_passing_forward.1} parent=63 // pred_check
          %p568 = pneg %p67
        $region66: #{message_passing_forward.1} parent=63 // pred_check_branch
          %570 = sbr.rel (%p568) target = $region68
        $region67: #{message_passing_forward.1} parent=63 // pred_region
          %p571 = scmp.lt.s32.totalorder %s40, 1
          %s572 = scalar_select %p571, %s40, 1
          %p573 = scmp.lt.s32.totalorder %s41, 0
          %s574 = scalar_select %p573, %s41, 0
          %s575 = smul.addr %s574, 2
          %s576 = smul.addr %s572, 2
          %s577 = sadd.s32 %s575, %s576
          %s578 = smul.addr %s577, 8
          %s579 = scalar_lea.vmem %s0, %s578
        $region68: #{message_passing_forward.1} parent=63 // pred_fallthru
          _
        // Predicated region
        $region69: #{message_passing_forward.1} parent=63 // pred_check
          %p580 = pneg %p95
        $region70: #{message_passing_forward.1} parent=63 // pred_check_branch
          %582 = sbr.rel (%p580) target = $region72
        $region71: #{message_passing_forward.1} parent=63 // pred_region
          %p583 = scmp.lt.s32.totalorder %s40, 1
          %s584 = scalar_select %p583, %s40, 1
          %p585 = scmp.lt.s32.totalorder %s41, 0
          %s586 = scalar_select %p585, %s41, 0
          %s587 = smul.addr %s586, 2
          %s588 = smul.addr %s584, 2
          %s589 = sadd.s32 %s587, %s588
          %s590 = smul.addr %s589, 8
          %s591 = scalar_lea.vmem %s1, %s590
        $region72: #{message_passing_forward.1} parent=63 // pred_fallthru
          _
        // Predicated region
        $region73: #{message_passing_forward.1} parent=63 // pred_check
          %p592 = pneg %p121
        $region74: #{message_passing_forward.1} parent=63 // pred_check_branch
          %594 = sbr.rel (%p592) target = $region76
        $region75: #{message_passing_forward.1} parent=63 // pred_region
          %p595 = scmp.lt.s32.totalorder %s40, 1
          %s596 = scalar_select %p595, %s40, 1
          %s597 = smul.addr %s596, 8
          %s598 = scalar_lea.vmem %s2, %s597
        $region76: #{message_passing_forward.1} parent=63 // pred_fallthru
          _
        // Predicated region
        $region77: #{message_passing_forward.1} parent=63 // pred_check
          %p599 = pneg %p149
        $region78: #{message_passing_forward.1} parent=63 // pred_check_branch
          %601 = sbr.rel (%p599) target = $region80
        $region79: #{message_passing_forward.1} parent=63 // pred_region
          %s602 = smul.u32 8, %s41
          %p603 = scmp.lt.s32.totalorder %s40, 1
          %s604 = scalar_select %p603, %s40, 1
          %p605 = scmp.lt.s32.totalorder %s602, 7
          %s606 = scalar_select %p605, %s602, 7
          %s607 = smul.addr %s604, 8
          %s608 = sadd.s32 %s606, %s607
          %s609 = smul.addr %s608, 8
          %s610 = scalar_lea.vmem %s3, %s609
          %s611 = smul.u32 8, %s41
        $region80: #{message_passing_forward.1} parent=63 // pred_fallthru
          _
        // Predicated region
        $region81: #{message_passing_forward.1} parent=63 // pred_check
          %p612 = pneg %p177
        $region82: #{message_passing_forward.1} parent=63 // pred_check_branch
          %614 = sbr.rel (%p612) target = $region84
        $region83: #{message_passing_forward.1} parent=63 // pred_region
          %p615 = scmp.lt.s32.totalorder %s40, 1
          %s616 = scalar_select %p615, %s40, 1
          %p617 = scmp.lt.s32.totalorder %s41, 0
          %s618 = scalar_select %p617, %s41, 0
          %s619 = sadd.s32 %s618, %s616
          %s620 = smul.addr %s619, 8
          %s621 = scalar_lea.vmem %s4, %s620
        $region84: #{message_passing_forward.1} parent=63 // pred_fallthru
          _
      $region64: #{message_passing_forward.1} parent=5 // pred_fallthru
        _
      %p622 = scmp.le.s32.totalorder 1, %s33
      %p623 = scmp.lt.s32.totalorder %s33, 3
      %p624 = pnand %p622, %p623
      %p625 = pneg %p624
      // Predicated region
      $region85: #{message_passing_forward.1} parent=5 // pred_check
        _
      $region86: #{message_passing_forward.1} parent=5 // pred_check_branch
        %627 = sbr.rel (%p624) target = $region88
      $region87: #{message_passing_forward.1} parent=5 // pred_region
        %s628 = ssub.s32 %s33, 1
        // Predicated region
        $region89: #{message_passing_forward.1} parent=87 // pred_check
          %p629 = pneg %p204
        $region90: #{message_passing_forward.1} parent=87 // pred_check_branch
          %631 = sbr.rel (%p629) target = $region92
        $region91: #{message_passing_forward.1} parent=87 // pred_region
          %633 = dma.done [#allocation3], 1024
        $region92: #{message_passing_forward.1} parent=87 // pred_fallthru
          _
        // Predicated region
        $region93: #{message_passing_forward.1} parent=87 // pred_check
          %p634 = pneg %p330
        $region94: #{message_passing_forward.1} parent=87 // pred_check_branch
          %636 = sbr.rel (%p634) target = $region96
        $region95: #{message_passing_forward.1} parent=87 // pred_region
          %638 = dma.done [#allocation6], 1024
        $region96: #{message_passing_forward.1} parent=87 // pred_fallthru
          _
        %p639 = scmp.lt.s32.totalorder %s42, 1
        %s640 = scalar_select %p639, %s42, 1
        %p641 = scmp.lt.s32.totalorder %s43, 0
        %s642 = scalar_select %p641, %s43, 0
        %s643 = smul.addr %s642, 2
        %s644 = smul.addr %s640, 2
        %s645 = sadd.s32 %s643, %s644
        %s646 = smul.addr %s645, 8
        %s647 = scalar_lea.vmem %s0, %s646
        %p648 = pneg %p73
        %p649 = pneg %p70
        %p650 = scmp.lt.s32.totalorder %s42, 1
        %s651 = scalar_select %p650, %s42, 1
        %p652 = scmp.lt.s32.totalorder %s43, 0
        %s653 = scalar_select %p652, %s43, 0
        %s654 = smul.addr %s653, 2
        %s655 = smul.addr %s651, 2
        %s656 = sadd.s32 %s654, %s655
        %s657 = smul.addr %s656, 8
        %s658 = scalar_lea.vmem %s1, %s657
        %p659 = pneg %p101
        %p660 = pneg %p98
        %p661 = scmp.lt.s32.totalorder %s42, 1
        %s662 = scalar_select %p661, %s42, 1
        %s663 = smul.addr %s662, 8
        %s664 = scalar_lea.vmem %s2, %s663
        %p665 = pneg %p127
        %p666 = pneg %p124
        %s667 = smul.u32 8, %s43
        %p668 = scmp.lt.s32.totalorder %s42, 1
        %s669 = scalar_select %p668, %s42, 1
        %p670 = scmp.lt.s32.totalorder %s667, 7
        %s671 = scalar_select %p670, %s667, 7
        %s672 = smul.addr %s669, 8
        %s673 = sadd.s32 %s671, %s672
        %s674 = smul.addr %s673, 8
        %s675 = scalar_lea.vmem %s3, %s674
        %p676 = pneg %p155
        %p677 = pneg %p152
        %p678 = scmp.lt.s32.totalorder %s42, 1
        %s679 = scalar_select %p678, %s42, 1
        %p680 = scmp.lt.s32.totalorder %s43, 0
        %s681 = scalar_select %p680, %s43, 0
        %s682 = sadd.s32 %s681, %s679
        %s683 = smul.addr %s682, 8
        %s684 = scalar_lea.vmem %s4, %s683
        %p685 = pneg %p183
        %p686 = pneg %p180
        %p687 = pneg %p204
        %p688 = pneg %p201
        %p689 = pneg %p225
        %p690 = pneg %p222
        %p691 = pneg %p246
        %p692 = pneg %p243
        %p693 = pneg %p267
        %p694 = pneg %p264
        %p695 = pneg %p288
        %p696 = pneg %p285
        %p697 = pneg %p309
        %p698 = pneg %p306
        %p699 = pneg %p330
        %p700 = pneg %p327
        %p701 = pneg %p351
        %p702 = pneg %p348
        %p703 = pneg %p372
        %p704 = pneg %p369
        %p705 = pneg %p393
        %p706 = pneg %p390
        %p707 = pneg %p414
        %p708 = pneg %p411
        %p709 = pneg %p435
        %p710 = pneg %p432
        %p711 = pneg %p463
        %p712 = pneg %p460
        %s713 = sand.u32 %s450, 1
        %s714 = scalar_lea.sflag [#allocation4], %s713
        %s715 = sand.u32 %s450, 1
        %s716 = smul.addr %s715, 16
        %s717 = scalar_lea.vmem [#allocation7], %s716
        %p718 = pneg %p491
        %p719 = pneg %p488
        %s720 = sand.u32 %s478, 1
        %s721 = scalar_lea.sflag [#allocation9], %s720
        %s722 = sand.u32 %s478, 1
        %s723 = smul.addr %s722, 64
        %s724 = scalar_lea.vmem [#allocation8], %s723
        %p725 = scmp.lt.s32.totalorder %s42, 1
        %s726 = scalar_select %p725, %s42, 1
        %p727 = scmp.lt.s32.totalorder %s43, 0
        %s728 = scalar_select %p727, %s43, 0
        %s729 = smul.addr %s728, 2
        %s730 = smul.addr %s726, 2
        %s731 = sadd.s32 %s729, %s730
        %s732 = smul.addr %s731, 8
        %s733 = scalar_lea.vmem %s0, %s732
        %p734 = scmp.lt.s32.totalorder %s42, 1
        %s735 = scalar_select %p734, %s42, 1
        %p736 = scmp.lt.s32.totalorder %s43, 0
        %s737 = scalar_select %p736, %s43, 0
        %s738 = smul.addr %s737, 2
        %s739 = smul.addr %s735, 2
        %s740 = sadd.s32 %s738, %s739
        %s741 = smul.addr %s740, 8
        %s742 = scalar_lea.vmem %s1, %s741
        %p743 = scmp.lt.s32.totalorder %s42, 1
        %s744 = scalar_select %p743, %s42, 1
        %s745 = smul.addr %s744, 8
        %s746 = scalar_lea.vmem %s2, %s745
        %s747 = smul.u32 8, %s43
        %p748 = scmp.lt.s32.totalorder %s42, 1
        %s749 = scalar_select %p748, %s42, 1
        %p750 = scmp.lt.s32.totalorder %s747, 7
        %s751 = scalar_select %p750, %s747, 7
        %s752 = smul.addr %s749, 8
        %s753 = sadd.s32 %s751, %s752
        %s754 = smul.addr %s753, 8
        %s755 = scalar_lea.vmem %s3, %s754
        %s756 = smul.u32 8, %s43
        %p757 = scmp.lt.s32.totalorder %s42, 1
        %s758 = scalar_select %p757, %s42, 1
        %p759 = scmp.lt.s32.totalorder %s43, 0
        %s760 = scalar_select %p759, %s43, 0
        %s761 = sadd.s32 %s760, %s758
        %s762 = smul.addr %s761, 8
        %s763 = scalar_lea.vmem %s4, %s762
        %s764 = smul.u32 8, %s43
        %v765 = vld [vmem:[%s733] sm:$0xff]
        %v766 = vld [vmem:[%s733 + $0x8] sm:$0xff]
        %v767 = vld [vmem:[%s742] sm:$0xff]
        %v768 = vld [vmem:[%s742 + $0x8] sm:$0xff]
        %v769 = vld [vmem:[%s746] sm:$0xff]
        %v770 = vld [vmem:[%s755] sm:$0xff]
        %v771 = vld [vmem:[%s755 + $0x8] sm:$0xff]
        %v772 = vld [vmem:[%s755 + $0x10] sm:$0xff]
        %v773 = vld [vmem:[%s755 + $0x18] sm:$0xff]
        %v774 = vld [vmem:[%s755 + $0x20] sm:$0xff]
        %v775 = vld [vmem:[%s755 + $0x28] sm:$0xff]
        %v776 = vld [vmem:[%s755 + $0x30] sm:$0xff]
        %v777 = vld [vmem:[%s755 + $0x38] sm:$0xff]
        %v778 = vld [vmem:[%s763] sm:$0xff]
        %v779 = vperm.slane %v778, 0
        %v780 = vlaneseq
        %v781 = vshrl.u32 %v780, 7
        %783 = vset.pattern.permute.xlu0 %v781
        %784 = vperm.xlu0 %783, %v779
        %v785 = vpop.permute.xlu0 %784
        %v786 = vperm.slane %v778, 1
        %v787 = vlaneseq
        %v788 = vshrl.u32 %v787, 7
        %790 = vset.pattern.permute.xlu0 %v788
        %791 = vperm.xlu0 %790, %v786
        %v792 = vpop.permute.xlu0 %791
        %v793 = vperm.slane %v778, 2
        %v794 = vlaneseq
        %v795 = vshrl.u32 %v794, 7
        %797 = vset.pattern.permute.xlu0 %v795
        %798 = vperm.xlu0 %797, %v793
        %v799 = vpop.permute.xlu0 %798
        %v800 = vperm.slane %v778, 3
        %v801 = vlaneseq
        %v802 = vshrl.u32 %v801, 7
        %804 = vset.pattern.permute.xlu0 %v802
        %805 = vperm.xlu0 %804, %v800
        %v806 = vpop.permute.xlu0 %805
        %v807 = vperm.slane %v778, 4
        %v808 = vlaneseq
        %v809 = vshrl.u32 %v808, 7
        %811 = vset.pattern.permute.xlu0 %v809
        %812 = vperm.xlu0 %811, %v807
        %v813 = vpop.permute.xlu0 %812
        %v814 = vperm.slane %v778, 5
        %v815 = vlaneseq
        %v816 = vshrl.u32 %v815, 7
        %818 = vset.pattern.permute.xlu0 %v816
        %819 = vperm.xlu0 %818, %v814
        %v820 = vpop.permute.xlu0 %819
        %v821 = vperm.slane %v778, 6
        %v822 = vlaneseq
        %v823 = vshrl.u32 %v822, 7
        %825 = vset.pattern.permute.xlu0 %v823
        %826 = vperm.xlu0 %825, %v821
        %v827 = vpop.permute.xlu0 %826
        %v828 = vperm.slane %v778, 7
        %v829 = vlaneseq
        %v830 = vshrl.u32 %v829, 7
        %832 = vset.pattern.permute.xlu0 %v830
        %833 = vperm.xlu0 %832, %v828
        %v834 = vpop.permute.xlu0 %833
        %v835 = vmul.f32 %v770, %v785
        %v836 = vmul.f32 %v771, %v792
        %v837 = vmul.f32 %v772, %v799
        %v838 = vmul.f32 %v773, %v806
        %v839 = vmul.f32 %v774, %v813
        %v840 = vmul.f32 %v775, %v820
        %v841 = vmul.f32 %v776, %v827
        %v842 = vmul.f32 %v777, %v834
        %vm843 = vcmask 523264
        %v844 = vsel %vm843, %v835, 0.0
        %v845 = vrot.slane %v844, 4
        %v846 = vadd.f32 %v844, %v845
        %v847 = vrot.slane %v846, 2
        %v848 = vadd.f32 %v846, %v847
        %v849 = vrot.slane %v848, 1
        %v850 = vadd.f32 %v848, %v849
        %v851 = vsel %vm843, %v836, 0.0
        %v852 = vrot.slane %v851, 4
        %v853 = vadd.f32 %v851, %v852
        %v854 = vrot.slane %v853, 2
        %v855 = vadd.f32 %v853, %v854
        %v856 = vrot.slane %v855, 1
        %v857 = vadd.f32 %v855, %v856
        %v858 = vsel %vm843, %v837, 0.0
        %v859 = vrot.slane %v858, 4
        %v860 = vadd.f32 %v858, %v859
        %v861 = vrot.slane %v860, 2
        %v862 = vadd.f32 %v860, %v861
        %v863 = vrot.slane %v862, 1
        %v864 = vadd.f32 %v862, %v863
        %v865 = vsel %vm843, %v838, 0.0
        %v866 = vrot.slane %v865, 4
        %v867 = vadd.f32 %v865, %v866
        %v868 = vrot.slane %v867, 2
        %v869 = vadd.f32 %v867, %v868
        %v870 = vrot.slane %v869, 1
        %v871 = vadd.f32 %v869, %v870
        %v872 = vsel %vm843, %v839, 0.0
        %v873 = vrot.slane %v872, 4
        %v874 = vadd.f32 %v872, %v873
        %v875 = vrot.slane %v874, 2
        %v876 = vadd.f32 %v874, %v875
        %v877 = vrot.slane %v876, 1
        %v878 = vadd.f32 %v876, %v877
        %v879 = vsel %vm843, %v840, 0.0
        %v880 = vrot.slane %v879, 4
        %v881 = vadd.f32 %v879, %v880
        %v882 = vrot.slane %v881, 2
        %v883 = vadd.f32 %v881, %v882
        %v884 = vrot.slane %v883, 1
        %v885 = vadd.f32 %v883, %v884
        %v886 = vsel %vm843, %v841, 0.0
        %v887 = vrot.slane %v886, 4
        %v888 = vadd.f32 %v886, %v887
        %v889 = vrot.slane %v888, 2
        %v890 = vadd.f32 %v888, %v889
        %v891 = vrot.slane %v890, 1
        %v892 = vadd.f32 %v890, %v891
        %v893 = vsel %vm843, %v842, 0.0
        %v894 = vrot.slane %v893, 4
        %v895 = vadd.f32 %v893, %v894
        %v896 = vrot.slane %v895, 2
        %v897 = vadd.f32 %v895, %v896
        %v898 = vrot.slane %v897, 1
        %v899 = vadd.f32 %v897, %v898
        %v900 = vld [vmem:[#allocation2] sm:$0xff]
        %v901 = vld [vmem:[#allocation2 + $0x8] sm:$0xff]
        %v902 = vld [vmem:[#allocation2 + $0x10] sm:$0xff]
        %v903 = vld [vmem:[#allocation2 + $0x18] sm:$0xff]
        %v904 = vld [vmem:[#allocation2 + $0x20] sm:$0xff]
        %v905 = vld [vmem:[#allocation2 + $0x28] sm:$0xff]
        %v906 = vld [vmem:[#allocation2 + $0x30] sm:$0xff]
        %v907 = vld [vmem:[#allocation2 + $0x38] sm:$0xff]
        %vm916 = vcmask 1041409
        %v917 = vsel %vm916, %v857, %v850
        %vm918 = vcmask 1042434
        %v919 = vsel %vm918, %v864, %v917
        %vm920 = vcmask 1043459
        %v921 = vsel %vm920, %v871, %v919
        %vm922 = vcmask 1044484
        %v923 = vsel %vm922, %v878, %v921
        %vm924 = vcmask 1045509
        %v925 = vsel %vm924, %v885, %v923
        %vm926 = vcmask 1046534
        %v927 = vsel %vm926, %v892, %v925
        %vm928 = vcmask 1047559
        %v929 = vsel %vm928, %v899, %v927
        %v930 = vsel %vm843, %v929, 0
        %932 = vmatpush.msra.mxu0 0.0
        %933 = vmatpush.msra.mxu0 0.0
        %934 = vmatpush.msra.mxu0 0.0
        %935 = vmatpush.msra.mxu0 0.0
        %936 = vmatpush.msra.mxu0 0.0
        %937 = vmatpush.msra.mxu0 0.0
        %938 = vmatpush.msra.mxu0 0.0
        %939 = vmatpush.msra.mxu0 0.0
        %940 = vmatpush.msra.mxu0 %v907
        %941 = vmatpush.msra.mxu0 %v906
        %942 = vmatpush.msra.mxu0 %v905
        %943 = vmatpush.msra.mxu0 %v904
        %944 = vmatpush.msra.mxu0 %v903
        %945 = vmatpush.msra.mxu0 %v902
        %946 = vmatpush.msra.mxu0 %v901
        %947 = vmatpush.msra.mxu0 %v900
        %948 = vmatmul.f32.gmra.mxu0 %v930
        %v949 = vpop.f32.mrf.mxu0
        %v950 = vadd.f32 %v768, %v949
        %951 = vdwg.mxu0
        %v952 = vld [vmem:[%s6] sm:$0x1]
        %v954 = vperm.slane %v952, 0
        %v956 = vadd.f32 %v950, %v954
        %v957 = vld [vmem:[%s7] sm:$0x1]
        %v958 = vld [vmem:[%s8] sm:$0x1]
        %959 = vadd.xlane.f32.xlu0 %v956
        %v960 = vpop.xlane.xlu0 %959
        %v961 = vrcp.pop 128.0
        %v962 = vmul.f32 128.0, %v961
        %v963 = vsub.f32 1.0, %v962
        %v964 = vmul.f32 %v961, %v963
        %v965 = vadd.f32 %v961, %v964
        %vm966 = vweird.f32 %v961
        %v967 = vsel %vm966, %v961, %v965
        %v968 = vmul.f32 %v960, %v967
        %v969 = vsub.f32 %v956, %v968
        %v970 = vmul.f32 %v969, %v969
        %971 = vadd.xlane.f32.xlu0 %v970
        %v972 = vpop.xlane.xlu0 %971
        %v973 = vmul.f32 %v972, %v967
        %v974 = vadd.f32 %v973, 1e-05
        %v975 = vrsqrt.pop %v974
        %v976 = vmul.f32 %v975, %v974
        %v977 = vmul.f32 %v976, %v975
        %v978 = vmul.f32 0.5, %v977
        %v979 = vsub.f32 1.5, %v978
        %v980 = vmul.f32 %v975, %v979
        %vm981 = vweird.f32 %v974
        %vm982 = vweird.f32 %v975
        %vm983 = vmor %vm981, %vm982
        %v984 = vsel %vm983, %v975, %v980
        %v985 = vmul.f32 %v969, %v984
        %v987 = vperm.slane %v957, 0
        %v989 = vmul.f32 %v985, %v987
        %v991 = vperm.slane %v958, 0
        %v993 = vadd.f32 %v989, %v991
        %v994 = vmax.f32 %v993, 0.0
        %v995 = vld [vmem:[%s9] sm:$0xff]
        %v996 = vld [vmem:[%s9 + $0x8] sm:$0xff]
        %v997 = vld [vmem:[%s9 + $0x10] sm:$0xff]
        %v998 = vld [vmem:[%s9 + $0x18] sm:$0xff]
        %v999 = vld [vmem:[%s9 + $0x20] sm:$0xff]
        %v1000 = vld [vmem:[%s9 + $0x28] sm:$0xff]
        %v1001 = vld [vmem:[%s9 + $0x30] sm:$0xff]
        %v1002 = vld [vmem:[%s9 + $0x38] sm:$0xff]
        %v1003 = vld [vmem:[%s9 + $0x40] sm:$0xff]
        %v1004 = vld [vmem:[%s9 + $0x48] sm:$0xff]
        %v1005 = vld [vmem:[%s9 + $0x50] sm:$0xff]
        %v1006 = vld [vmem:[%s9 + $0x58] sm:$0xff]
        %v1007 = vld [vmem:[%s9 + $0x60] sm:$0xff]
        %v1008 = vld [vmem:[%s9 + $0x68] sm:$0xff]
        %v1009 = vld [vmem:[%s9 + $0x70] sm:$0xff]
        %v1010 = vld [vmem:[%s9 + $0x78] sm:$0xff]
        %v1011 = vld [vmem:[%s9 + $0x80] sm:$0xff]
        %v1012 = vld [vmem:[%s9 + $0x88] sm:$0xff]
        %v1013 = vld [vmem:[%s9 + $0x90] sm:$0xff]
        %v1014 = vld [vmem:[%s9 + $0x98] sm:$0xff]
        %v1015 = vld [vmem:[%s9 + $0xa0] sm:$0xff]
        %v1016 = vld [vmem:[%s9 + $0xa8] sm:$0xff]
        %v1017 = vld [vmem:[%s9 + $0xb0] sm:$0xff]
        %v1018 = vld [vmem:[%s9 + $0xb8] sm:$0xff]
        %v1019 = vld [vmem:[%s9 + $0xc0] sm:$0xff]
        %v1020 = vld [vmem:[%s9 + $0xc8] sm:$0xff]
        %v1021 = vld [vmem:[%s9 + $0xd0] sm:$0xff]
        %v1022 = vld [vmem:[%s9 + $0xd8] sm:$0xff]
        %v1023 = vld [vmem:[%s9 + $0xe0] sm:$0xff]
        %v1024 = vld [vmem:[%s9 + $0xe8] sm:$0xff]
        %v1025 = vld [vmem:[%s9 + $0xf0] sm:$0xff]
        %v1026 = vld [vmem:[%s9 + $0xf8] sm:$0xff]
        %v1027 = vld [vmem:[%s10] sm:$0x3]
        %v1029 = vperm.slane %v1027, 0
        %v1030 = vperm.slane %v1027, 1
        %1033 = vmatpush.msra.mxu0 %v1025
        %1034 = vmatpush.msra.mxu0 %v1023
        %1035 = vmatpush.msra.mxu0 %v1021
        %1036 = vmatpush.msra.mxu0 %v1019
        %1037 = vmatpush.msra.mxu0 %v1017
        %1038 = vmatpush.msra.mxu0 %v1015
        %1039 = vmatpush.msra.mxu0 %v1013
        %1040 = vmatpush.msra.mxu0 %v1011
        %1041 = vmatpush.msra.mxu0 %v1009
        %1042 = vmatpush.msra.mxu0 %v1007
        %1043 = vmatpush.msra.mxu0 %v1005
        %1044 = vmatpush.msra.mxu0 %v1003
        %1045 = vmatpush.msra.mxu0 %v1001
        %1046 = vmatpush.msra.mxu0 %v999
        %1047 = vmatpush.msra.mxu0 %v997
        %1048 = vmatpush.msra.mxu0 %v995
        %1049 = vmatmul.f32.gmra.mxu0 %v994
        %v1050 = vpop.f32.mrf.mxu0
        %v1051 = vadd.f32 %v1029, %v1050
        %1052 = vdwg.mxu0
        %1053 = vmatpush.msra.mxu0 %v1026
        %1054 = vmatpush.msra.mxu0 %v1024
        %1055 = vmatpush.msra.mxu0 %v1022
        %1056 = vmatpush.msra.mxu0 %v1020
        %1057 = vmatpush.msra.mxu0 %v1018
        %1058 = vmatpush.msra.mxu0 %v1016
        %1059 = vmatpush.msra.mxu0 %v1014
        %1060 = vmatpush.msra.mxu0 %v1012
        %1061 = vmatpush.msra.mxu0 %v1010
        %1062 = vmatpush.msra.mxu0 %v1008
        %1063 = vmatpush.msra.mxu0 %v1006
        %1064 = vmatpush.msra.mxu0 %v1004
        %1065 = vmatpush.msra.mxu0 %v1002
        %1066 = vmatpush.msra.mxu0 %v1000
        %1067 = vmatpush.msra.mxu0 %v998
        %1068 = vmatpush.msra.mxu0 %v996
        %1069 = vmatmul.f32.gmra.mxu0 %v994
        %v1070 = vpop.f32.mrf.mxu0
        %v1071 = vadd.f32 %v1030, %v1070
        %1072 = vdwg.mxu0
        %v1073 = vadd.f32 %v765, %v1051
        %v1074 = vadd.f32 %v766, %v1071
        %1075 = vst [vmem:[%s717] sm:$0xff] %v1073
        %1076 = vst [vmem:[%s717 + $0x8] sm:$0xff] %v1074
        %v1077 = vld [vmem:[#allocation5] sm:$0xff]
        %v1078 = vld [vmem:[#allocation5 + $0x8] sm:$0xff]
        %v1079 = vld [vmem:[#allocation5 + $0x10] sm:$0xff]
        %v1080 = vld [vmem:[#allocation5 + $0x18] sm:$0xff]
        %v1081 = vld [vmem:[#allocation5 + $0x20] sm:$0xff]
        %v1082 = vld [vmem:[#allocation5 + $0x28] sm:$0xff]
        %v1083 = vld [vmem:[#allocation5 + $0x30] sm:$0xff]
        %v1084 = vld [vmem:[#allocation5 + $0x38] sm:$0xff]
        %v1086 = vsel %vm843, %v770, 0
        %v1089 = vsel %vm843, %v771, 0
        %v1092 = vsel %vm843, %v772, 0
        %v1095 = vsel %vm843, %v773, 0
        %v1098 = vsel %vm843, %v774, 0
        %v1101 = vsel %vm843, %v775, 0
        %v1104 = vsel %vm843, %v776, 0
        %v1107 = vsel %vm843, %v777, 0
        %1109 = vmatpush.msra.mxu0 0.0
        %1110 = vmatpush.msra.mxu0 0.0
        %1111 = vmatpush.msra.mxu0 0.0
        %1112 = vmatpush.msra.mxu0 0.0
        %1113 = vmatpush.msra.mxu0 0.0
        %1114 = vmatpush.msra.mxu0 0.0
        %1115 = vmatpush.msra.mxu0 0.0
        %1116 = vmatpush.msra.mxu0 0.0
        %1117 = vmatpush.msra.mxu0 %v1084
        %1118 = vmatpush.msra.mxu0 %v1083
        %1119 = vmatpush.msra.mxu0 %v1082
        %1120 = vmatpush.msra.mxu0 %v1081
        %1121 = vmatpush.msra.mxu0 %v1080
        %1122 = vmatpush.msra.mxu0 %v1079
        %1123 = vmatpush.msra.mxu0 %v1078
        %1124 = vmatpush.msra.mxu0 %v1077
        %1125 = vmatmul.f32.gmra.mxu0 %v1086
        %v1126 = vpop.f32.mrf.mxu0
        %v1127 = vadd.f32 0.0, %v1126
        %1128 = vmatmul.f32.gmra.mxu0 %v1089
        %v1129 = vpop.f32.mrf.mxu0
        %v1130 = vadd.f32 0.0, %v1129
        %1131 = vmatmul.f32.gmra.mxu0 %v1092
        %v1132 = vpop.f32.mrf.mxu0
        %v1133 = vadd.f32 0.0, %v1132
        %1134 = vmatmul.f32.gmra.mxu0 %v1095
        %v1135 = vpop.f32.mrf.mxu0
        %v1136 = vadd.f32 0.0, %v1135
        %1137 = vmatmul.f32.gmra.mxu0 %v1098
        %v1138 = vpop.f32.mrf.mxu0
        %v1139 = vadd.f32 0.0, %v1138
        %1140 = vmatmul.f32.gmra.mxu0 %v1101
        %v1141 = vpop.f32.mrf.mxu0
        %v1142 = vadd.f32 0.0, %v1141
        %1143 = vmatmul.f32.gmra.mxu0 %v1104
        %v1144 = vpop.f32.mrf.mxu0
        %v1145 = vadd.f32 0.0, %v1144
        %1146 = vmatmul.f32.gmra.mxu0 %v1107
        %v1147 = vpop.f32.mrf.mxu0
        %v1148 = vadd.f32 0.0, %v1147
        %1149 = vdwg.mxu0
        %v1151 = vrot.slane %v767, 1
        %v1152 = vrot.slane %v767, 2
        %v1153 = vrot.slane %v767, 3
        %v1154 = vrot.slane %v767, 4
        %v1155 = vrot.slane %v767, 5
        %v1156 = vrot.slane %v767, 6
        %v1157 = vrot.slane %v767, 7
        %v1158 = vperm.slane %v767, 0
        %v1159 = vperm.slane %v1151, 0
        %v1160 = vperm.slane %v1152, 0
        %v1161 = vperm.slane %v1153, 0
        %v1162 = vperm.slane %v1154, 0
        %v1163 = vperm.slane %v1155, 0
        %v1164 = vperm.slane %v1156, 0
        %v1165 = vperm.slane %v1157, 0
        %v1174 = vadd.f32 %v1127, %v1158
        %v1175 = vadd.f32 %v1130, %v1159
        %v1176 = vadd.f32 %v1133, %v1160
        %v1177 = vadd.f32 %v1136, %v1161
        %v1178 = vadd.f32 %v1139, %v1162
        %v1179 = vadd.f32 %v1142, %v1163
        %v1180 = vadd.f32 %v1145, %v1164
        %v1181 = vadd.f32 %v1148, %v1165
        %v1182 = vadd.f32 %v1174, %v769
        %v1183 = vadd.f32 %v1175, %v769
        %v1184 = vadd.f32 %v1176, %v769
        %v1185 = vadd.f32 %v1177, %v769
        %v1186 = vadd.f32 %v1178, %v769
        %v1187 = vadd.f32 %v1179, %v769
        %v1188 = vadd.f32 %v1180, %v769
        %v1189 = vadd.f32 %v1181, %v769
        %v1190 = vld [vmem:[%s12] sm:$0x1]
        %v1192 = vperm.slane %v1190, 0
        %v1194 = vadd.f32 %v1182, %v1192
        %v1195 = vadd.f32 %v1183, %v1192
        %v1196 = vadd.f32 %v1184, %v1192
        %v1197 = vadd.f32 %v1185, %v1192
        %v1198 = vadd.f32 %v1186, %v1192
        %v1199 = vadd.f32 %v1187, %v1192
        %v1200 = vadd.f32 %v1188, %v1192
        %v1201 = vadd.f32 %v1189, %v1192
        %v1202 = vld [vmem:[%s13] sm:$0x1]
        %v1203 = vld [vmem:[%s14] sm:$0x1]
        %1204 = vadd.xlane.f32.xlu0 %v1194
        %v1205 = vpop.xlane.xlu0 %1204
        %1206 = vadd.xlane.f32.xlu0 %v1195
        %v1207 = vpop.xlane.xlu0 %1206
        %1208 = vadd.xlane.f32.xlu0 %v1196
        %v1209 = vpop.xlane.xlu0 %1208
        %1210 = vadd.xlane.f32.xlu0 %v1197
        %v1211 = vpop.xlane.xlu0 %1210
        %1212 = vadd.xlane.f32.xlu0 %v1198
        %v1213 = vpop.xlane.xlu0 %1212
        %1214 = vadd.xlane.f32.xlu0 %v1199
        %v1215 = vpop.xlane.xlu0 %1214
        %1216 = vadd.xlane.f32.xlu0 %v1200
        %v1217 = vpop.xlane.xlu0 %1216
        %1218 = vadd.xlane.f32.xlu0 %v1201
        %v1219 = vpop.xlane.xlu0 %1218
        %v1220 = vmul.f32 %v1205, %v967
        %v1221 = vmul.f32 %v1207, %v967
        %v1222 = vmul.f32 %v1209, %v967
        %v1223 = vmul.f32 %v1211, %v967
        %v1224 = vmul.f32 %v1213, %v967
        %v1225 = vmul.f32 %v1215, %v967
        %v1226 = vmul.f32 %v1217, %v967
        %v1227 = vmul.f32 %v1219, %v967
        %v1228 = vsub.f32 %v1194, %v1220
        %v1229 = vsub.f32 %v1195, %v1221
        %v1230 = vsub.f32 %v1196, %v1222
        %v1231 = vsub.f32 %v1197, %v1223
        %v1232 = vsub.f32 %v1198, %v1224
        %v1233 = vsub.f32 %v1199, %v1225
        %v1234 = vsub.f32 %v1200, %v1226
        %v1235 = vsub.f32 %v1201, %v1227
        %v1236 = vmul.f32 %v1228, %v1228
        %v1237 = vmul.f32 %v1229, %v1229
        %v1238 = vmul.f32 %v1230, %v1230
        %v1239 = vmul.f32 %v1231, %v1231
        %v1240 = vmul.f32 %v1232, %v1232
        %v1241 = vmul.f32 %v1233, %v1233
        %v1242 = vmul.f32 %v1234, %v1234
        %v1243 = vmul.f32 %v1235, %v1235
        %1244 = vadd.xlane.f32.xlu0 %v1236
        %v1245 = vpop.xlane.xlu0 %1244
        %1246 = vadd.xlane.f32.xlu0 %v1237
        %v1247 = vpop.xlane.xlu0 %1246
        %1248 = vadd.xlane.f32.xlu0 %v1238
        %v1249 = vpop.xlane.xlu0 %1248
        %1250 = vadd.xlane.f32.xlu0 %v1239
        %v1251 = vpop.xlane.xlu0 %1250
        %1252 = vadd.xlane.f32.xlu0 %v1240
        %v1253 = vpop.xlane.xlu0 %1252
        %1254 = vadd.xlane.f32.xlu0 %v1241
        %v1255 = vpop.xlane.xlu0 %1254
        %1256 = vadd.xlane.f32.xlu0 %v1242
        %v1257 = vpop.xlane.xlu0 %1256
        %1258 = vadd.xlane.f32.xlu0 %v1243
        %v1259 = vpop.xlane.xlu0 %1258
        %v1260 = vmul.f32 %v1245, %v967
        %v1261 = vmul.f32 %v1247, %v967
        %v1262 = vmul.f32 %v1249, %v967
        %v1263 = vmul.f32 %v1251, %v967
        %v1264 = vmul.f32 %v1253, %v967
        %v1265 = vmul.f32 %v1255, %v967
        %v1266 = vmul.f32 %v1257, %v967
        %v1267 = vmul.f32 %v1259, %v967
        %v1268 = vadd.f32 %v1260, 1e-05
        %v1269 = vadd.f32 %v1261, 1e-05
        %v1270 = vadd.f32 %v1262, 1e-05
        %v1271 = vadd.f32 %v1263, 1e-05
        %v1272 = vadd.f32 %v1264, 1e-05
        %v1273 = vadd.f32 %v1265, 1e-05
        %v1274 = vadd.f32 %v1266, 1e-05
        %v1275 = vadd.f32 %v1267, 1e-05
        %v1276 = vrsqrt.pop %v1268
        %v1277 = vmul.f32 %v1276, %v1268
        %v1278 = vmul.f32 %v1277, %v1276
        %v1279 = vmul.f32 0.5, %v1278
        %v1280 = vsub.f32 1.5, %v1279
        %v1281 = vmul.f32 %v1276, %v1280
        %vm1282 = vweird.f32 %v1268
        %vm1283 = vweird.f32 %v1276
        %vm1284 = vmor %vm1282, %vm1283
        %v1285 = vsel %vm1284, %v1276, %v1281
        %v1286 = vrsqrt.pop %v1269
        %v1287 = vmul.f32 %v1286, %v1269
        %v1288 = vmul.f32 %v1287, %v1286
        %v1289 = vmul.f32 0.5, %v1288
        %v1290 = vsub.f32 1.5, %v1289
        %v1291 = vmul.f32 %v1286, %v1290
        %vm1292 = vweird.f32 %v1269
        %vm1293 = vweird.f32 %v1286
        %vm1294 = vmor %vm1292, %vm1293
        %v1295 = vsel %vm1294, %v1286, %v1291
        %v1296 = vrsqrt.pop %v1270
        %v1297 = vmul.f32 %v1296, %v1270
        %v1298 = vmul.f32 %v1297, %v1296
        %v1299 = vmul.f32 0.5, %v1298
        %v1300 = vsub.f32 1.5, %v1299
        %v1301 = vmul.f32 %v1296, %v1300
        %vm1302 = vweird.f32 %v1270
        %vm1303 = vweird.f32 %v1296
        %vm1304 = vmor %vm1302, %vm1303
        %v1305 = vsel %vm1304, %v1296, %v1301
        %v1306 = vrsqrt.pop %v1271
        %v1307 = vmul.f32 %v1306, %v1271
        %v1308 = vmul.f32 %v1307, %v1306
        %v1309 = vmul.f32 0.5, %v1308
        %v1310 = vsub.f32 1.5, %v1309
        %v1311 = vmul.f32 %v1306, %v1310
        %vm1312 = vweird.f32 %v1271
        %vm1313 = vweird.f32 %v1306
        %vm1314 = vmor %vm1312, %vm1313
        %v1315 = vsel %vm1314, %v1306, %v1311
        %v1316 = vrsqrt.pop %v1272
        %v1317 = vmul.f32 %v1316, %v1272
        %v1318 = vmul.f32 %v1317, %v1316
        %v1319 = vmul.f32 0.5, %v1318
        %v1320 = vsub.f32 1.5, %v1319
        %v1321 = vmul.f32 %v1316, %v1320
        %vm1322 = vweird.f32 %v1272
        %vm1323 = vweird.f32 %v1316
        %vm1324 = vmor %vm1322, %vm1323
        %v1325 = vsel %vm1324, %v1316, %v1321
        %v1326 = vrsqrt.pop %v1273
        %v1327 = vmul.f32 %v1326, %v1273
        %v1328 = vmul.f32 %v1327, %v1326
        %v1329 = vmul.f32 0.5, %v1328
        %v1330 = vsub.f32 1.5, %v1329
        %v1331 = vmul.f32 %v1326, %v1330
        %vm1332 = vweird.f32 %v1273
        %vm1333 = vweird.f32 %v1326
        %vm1334 = vmor %vm1332, %vm1333
        %v1335 = vsel %vm1334, %v1326, %v1331
        %v1336 = vrsqrt.pop %v1274
        %v1337 = vmul.f32 %v1336, %v1274
        %v1338 = vmul.f32 %v1337, %v1336
        %v1339 = vmul.f32 0.5, %v1338
        %v1340 = vsub.f32 1.5, %v1339
        %v1341 = vmul.f32 %v1336, %v1340
        %vm1342 = vweird.f32 %v1274
        %vm1343 = vweird.f32 %v1336
        %vm1344 = vmor %vm1342, %vm1343
        %v1345 = vsel %vm1344, %v1336, %v1341
        %v1346 = vrsqrt.pop %v1275
        %v1347 = vmul.f32 %v1346, %v1275
        %v1348 = vmul.f32 %v1347, %v1346
        %v1349 = vmul.f32 0.5, %v1348
        %v1350 = vsub.f32 1.5, %v1349
        %v1351 = vmul.f32 %v1346, %v1350
        %vm1352 = vweird.f32 %v1275
        %vm1353 = vweird.f32 %v1346
        %vm1354 = vmor %vm1352, %vm1353
        %v1355 = vsel %vm1354, %v1346, %v1351
        %v1356 = vmul.f32 %v1228, %v1285
        %v1357 = vmul.f32 %v1229, %v1295
        %v1358 = vmul.f32 %v1230, %v1305
        %v1359 = vmul.f32 %v1231, %v1315
        %v1360 = vmul.f32 %v1232, %v1325
        %v1361 = vmul.f32 %v1233, %v1335
        %v1362 = vmul.f32 %v1234, %v1345
        %v1363 = vmul.f32 %v1235, %v1355
        %v1365 = vperm.slane %v1202, 0
        %v1367 = vmul.f32 %v1356, %v1365
        %v1368 = vmul.f32 %v1357, %v1365
        %v1369 = vmul.f32 %v1358, %v1365
        %v1370 = vmul.f32 %v1359, %v1365
        %v1371 = vmul.f32 %v1360, %v1365
        %v1372 = vmul.f32 %v1361, %v1365
        %v1373 = vmul.f32 %v1362, %v1365
        %v1374 = vmul.f32 %v1363, %v1365
        %v1376 = vperm.slane %v1203, 0
        %v1378 = vadd.f32 %v1367, %v1376
        %v1379 = vadd.f32 %v1368, %v1376
        %v1380 = vadd.f32 %v1369, %v1376
        %v1381 = vadd.f32 %v1370, %v1376
        %v1382 = vadd.f32 %v1371, %v1376
        %v1383 = vadd.f32 %v1372, %v1376
        %v1384 = vadd.f32 %v1373, %v1376
        %v1385 = vadd.f32 %v1374, %v1376
        %v1386 = vmax.f32 %v1378, 0.0
        %v1387 = vmax.f32 %v1379, 0.0
        %v1388 = vmax.f32 %v1380, 0.0
        %v1389 = vmax.f32 %v1381, 0.0
        %v1390 = vmax.f32 %v1382, 0.0
        %v1391 = vmax.f32 %v1383, 0.0
        %v1392 = vmax.f32 %v1384, 0.0
        %v1393 = vmax.f32 %v1385, 0.0
        %v1394 = vld [vmem:[%s15] sm:$0xff]
        %v1395 = vld [vmem:[%s15 + $0x8] sm:$0xff]
        %v1396 = vld [vmem:[%s15 + $0x10] sm:$0xff]
        %v1397 = vld [vmem:[%s15 + $0x18] sm:$0xff]
        %v1398 = vld [vmem:[%s15 + $0x20] sm:$0xff]
        %v1399 = vld [vmem:[%s15 + $0x28] sm:$0xff]
        %v1400 = vld [vmem:[%s15 + $0x30] sm:$0xff]
        %v1401 = vld [vmem:[%s15 + $0x38] sm:$0xff]
        %v1402 = vld [vmem:[%s15 + $0x40] sm:$0xff]
        %v1403 = vld [vmem:[%s15 + $0x48] sm:$0xff]
        %v1404 = vld [vmem:[%s15 + $0x50] sm:$0xff]
        %v1405 = vld [vmem:[%s15 + $0x58] sm:$0xff]
        %v1406 = vld [vmem:[%s15 + $0x60] sm:$0xff]
        %v1407 = vld [vmem:[%s15 + $0x68] sm:$0xff]
        %v1408 = vld [vmem:[%s15 + $0x70] sm:$0xff]
        %v1409 = vld [vmem:[%s15 + $0x78] sm:$0xff]
        %v1410 = vld [vmem:[%s16] sm:$0x1]
        %v1412 = vperm.slane %v1410, 0
        %1414 = vmatpush.msra.mxu0 %v1409
        %1415 = vmatpush.msra.mxu0 %v1408
        %1416 = vmatpush.msra.mxu0 %v1407
        %1417 = vmatpush.msra.mxu0 %v1406
        %1418 = vmatpush.msra.mxu0 %v1405
        %1419 = vmatpush.msra.mxu0 %v1404
        %1420 = vmatpush.msra.mxu0 %v1403
        %1421 = vmatpush.msra.mxu0 %v1402
        %1422 = vmatpush.msra.mxu0 %v1401
        %1423 = vmatpush.msra.mxu0 %v1400
        %1424 = vmatpush.msra.mxu0 %v1399
        %1425 = vmatpush.msra.mxu0 %v1398
        %1426 = vmatpush.msra.mxu0 %v1397
        %1427 = vmatpush.msra.mxu0 %v1396
        %1428 = vmatpush.msra.mxu0 %v1395
        %1429 = vmatpush.msra.mxu0 %v1394
        %1430 = vmatmul.f32.gmra.mxu0 %v1386
        %v1431 = vpop.f32.mrf.mxu0
        %v1432 = vadd.f32 %v1412, %v1431
        %1433 = vmatmul.f32.gmra.mxu0 %v1387
        %v1434 = vpop.f32.mrf.mxu0
        %v1435 = vadd.f32 %v1412, %v1434
        %1436 = vmatmul.f32.gmra.mxu0 %v1388
        %v1437 = vpop.f32.mrf.mxu0
        %v1438 = vadd.f32 %v1412, %v1437
        %1439 = vmatmul.f32.gmra.mxu0 %v1389
        %v1440 = vpop.f32.mrf.mxu0
        %v1441 = vadd.f32 %v1412, %v1440
        %1442 = vmatmul.f32.gmra.mxu0 %v1390
        %v1443 = vpop.f32.mrf.mxu0
        %v1444 = vadd.f32 %v1412, %v1443
        %1445 = vmatmul.f32.gmra.mxu0 %v1391
        %v1446 = vpop.f32.mrf.mxu0
        %v1447 = vadd.f32 %v1412, %v1446
        %1448 = vmatmul.f32.gmra.mxu0 %v1392
        %v1449 = vpop.f32.mrf.mxu0
        %v1450 = vadd.f32 %v1412, %v1449
        %1451 = vmatmul.f32.gmra.mxu0 %v1393
        %v1452 = vpop.f32.mrf.mxu0
        %v1453 = vadd.f32 %v1412, %v1452
        %1454 = vdwg.mxu0
        %v1455 = vadd.f32 %v770, %v1432
        %v1456 = vadd.f32 %v771, %v1435
        %v1457 = vadd.f32 %v772, %v1438
        %v1458 = vadd.f32 %v773, %v1441
        %v1459 = vadd.f32 %v774, %v1444
        %v1460 = vadd.f32 %v775, %v1447
        %v1461 = vadd.f32 %v776, %v1450
        %v1462 = vadd.f32 %v777, %v1453
        %1463 = vst.msk [vmem:[%s724] sm:$0xff] %vm843, %v1455
        %1464 = vst.msk [vmem:[%s724 + $0x8] sm:$0xff] %vm843, %v1456
        %1465 = vst.msk [vmem:[%s724 + $0x10] sm:$0xff] %vm843, %v1457
        %1466 = vst.msk [vmem:[%s724 + $0x18] sm:$0xff] %vm843, %v1458
        %1467 = vst.msk [vmem:[%s724 + $0x20] sm:$0xff] %vm843, %v1459
        %1468 = vst.msk [vmem:[%s724 + $0x28] sm:$0xff] %vm843, %v1460
        %1469 = vst.msk [vmem:[%s724 + $0x30] sm:$0xff] %vm843, %v1461
        %1470 = vst.msk [vmem:[%s724 + $0x38] sm:$0xff] %vm843, %v1462
        %s1471 = sand.u32 %s450, 1
        %s1472 = scalar_lea.sflag [#allocation4], %s1471
        %s1473 = sand.u32 %s450, 1
        %s1474 = smul.addr %s1473, 16
        %s1475 = scalar_lea.vmem [#allocation7], %s1474
        %s1476 = sand.u32 %s478, 1
        %s1477 = scalar_lea.sflag [#allocation9], %s1476
        %s1478 = sand.u32 %s478, 1
        %s1479 = smul.addr %s1478, 64
        %s1480 = scalar_lea.vmem [#allocation8], %s1479
        // Predicated region
        $region97: #{message_passing_forward.1} parent=87 // pred_check
          %p1481 = pneg %p460
        $region98: #{message_passing_forward.1} parent=87 // pred_check_branch
          %1483 = sbr.rel (%p1481) target = $region100
        $region99: #{message_passing_forward.1} parent=87 // pred_region
          %1485 = vsyncadd %s1472, 0
          %s1486 = smul.addr %s43, 2
          %s1487 = smul.addr %s42, 2
          %s1488 = sadd.s32 %s1486, %s1487
          %s1489 = smul.addr %s1488, 8
          %s1490 = scalar_lea.hbm %s17, %s1489
          %s1492 = sshll.u32 %s1475, 4
          %s1493 = int_to_ptr.vmem [resolvable:$true] %s1492
          %s1494 = sshll.u32 %s1490, 4
          %s1495 = int_to_ptr.hbm [resolvable:$true] %s1494
          %1497 = dma.vmem_to_hbm [thread:$0]  %s1493, 256, %s1495, %s1472
        $region100: #{message_passing_forward.1} parent=87 // pred_fallthru
          _
        // Predicated region
        $region101: #{message_passing_forward.1} parent=87 // pred_check
          %p1498 = pneg %p488
        $region102: #{message_passing_forward.1} parent=87 // pred_check_branch
          %1500 = sbr.rel (%p1498) target = $region104
        $region103: #{message_passing_forward.1} parent=87 // pred_region
          %s1501 = smul.u32 8, %s43
          %1503 = vsyncadd %s1477, 0
          %s1504 = smul.addr %s42, 8
          %s1505 = sadd.s32 %s1501, %s1504
          %s1506 = smul.addr %s1505, 8
          %s1507 = scalar_lea.hbm %s18, %s1506
          %s1508 = sshll.u32 %s1480, 4
          %s1509 = int_to_ptr.vmem [resolvable:$true] %s1508
          %s1510 = sshll.u32 %s1507, 4
          %s1511 = int_to_ptr.hbm [resolvable:$true] %s1510
          %1516 = dma.vmem_to_hbm [thread:$0]  %s1509, 1024, %s1511, %s1477, 128, 128, 8
        $region104: #{message_passing_forward.1} parent=87 // pred_fallthru
          _
      $region88: #{message_passing_forward.1} parent=5 // pred_fallthru
        _
      %p1517 = scmp.le.s32.totalorder 2, %s33
      // Predicated region
      $region105: #{message_passing_forward.1} parent=5 // pred_check
        %p1518 = pneg %p1517
      $region106: #{message_passing_forward.1} parent=5 // pred_check_branch
        %1520 = sbr.rel (%p1518) target = $region108
      $region107: #{message_passing_forward.1} parent=5 // pred_region
        %s1521 = ssub.s32 %s33, 2
        // Predicated region
        $region109: #{message_passing_forward.1} parent=107 // pred_check
          %p1522 = pneg %p466
        $region110: #{message_passing_forward.1} parent=107 // pred_check_branch
          %1524 = sbr.rel (%p1522) target = $region112
        $region111: #{message_passing_forward.1} parent=107 // pred_region
          %s1525 = sand.u32 %s451, 1
          %s1526 = scalar_lea.sflag [#allocation4], %s1525
          %s1527 = sand.u32 %s451, 1
          %s1528 = smul.addr %s1527, 16
          %s1529 = scalar_lea.vmem [#allocation7], %s1528
          %1531 = dma.done %s1526, 256
        $region112: #{message_passing_forward.1} parent=107 // pred_fallthru
          _
        // Predicated region
        $region113: #{message_passing_forward.1} parent=107 // pred_check
          %p1532 = pneg %p494
        $region114: #{message_passing_forward.1} parent=107 // pred_check_branch
          %1534 = sbr.rel (%p1532) target = $region116
        $region115: #{message_passing_forward.1} parent=107 // pred_region
          %s1535 = sand.u32 %s479, 1
          %s1536 = scalar_lea.sflag [#allocation9], %s1535
          %s1537 = sand.u32 %s479, 1
          %s1538 = smul.addr %s1537, 64
          %s1539 = scalar_lea.vmem [#allocation8], %s1538
          %1541 = dma.done %s1536, 1024
        $region116: #{message_passing_forward.1} parent=107 // pred_fallthru
          _
      $region108: #{message_passing_forward.1} parent=5 // pred_fallthru
        _
    $region6: #{message_passing_forward.1} parent=1 // loop_footer
      %s37 = sadd.s32 1, %s33
    $region7: #{message_passing_forward.1} parent=1 // loop_footer_branch
      %32 = sbr.rel target = $region3
    $region8: #{message_passing_forward.1} parent=1 // loop_exit
      _
    %1542 = vsyncpa [#allocation3], 1
    %s1543 = scalar_lea.sflag [#allocation3], 1
    %1544 = vsyncpa %s1543, 1
    %1545 = vsyncpa [#allocation6], 1
    %1546 = vsyncpa [#allocation4], 1
    %s1547 = scalar_lea.sflag [#allocation4], 1
    %1548 = vsyncpa %s1547, 1
    %1549 = vsyncpa [#allocation9], 1
    %s1550 = scalar_lea.sflag [#allocation9], 1
    %1551 = vsyncpa %s1550, 1

</llo_original>
